<compile_context>
chip_gen: v5e
topology: v5e:2x2
jax: 0.10.0
libtpu: 0.0.40
codegen_flags: <defaults>
</compile_context>

<pallas_src>
import functools
import math

import jax
import jax.numpy as jnp
from jax.experimental import pallas as pl
from jax.experimental.pallas import tpu as pltpu


def _ceil_to(x, m):
    return ((x + m - 1) // m) * m


def _vmem_limit_bytes():
    # Generation-aware scoped-VMEM limit.  get_tpu_info() may report per-chip
    # capacity; clamp so that even on v7x (64 MiB per TensorCore physical) we
    # stay well under the per-core capacity with headroom for compiler scratch.
    try:
        cap = pltpu.get_tpu_info().vmem_capacity_bytes
    except Exception:
        cap = 64 * 1024 * 1024
    return int(min(cap * 5 // 8, 44 * 1024 * 1024))


_VMEM_LIMIT = _vmem_limit_bytes()

# Total bytes allowed for the double-buffered bf16 weight tiles of one GEMM.
_W_TILE_BUDGET = 16 * 1024 * 1024
_TN_CAP = 1280            # target N tile (full N for the 1280-wide layers)


def _split_dim(dim, cap):
    """Pad `dim` to 128 and split it into equal 128-multiple tiles <= ~cap."""
    dim_p = _ceil_to(dim, 128)
    if dim_p <= cap:
        return dim_p, dim_p
    n = -(-dim_p // cap)
    tile = _ceil_to(-(-dim_p // n), 128)
    return tile, tile * n


def _plan_gemm(K, N, n_weights=1):
    """Tile plan (TK, Kp, TN, Np) for a weight-streaming GEMM.

    The same plan is used at parameter-pack time (weights padded once to
    (Kp, Np) bf16) and at call time (grid construction), so weights are never
    re-padded/re-cast per call.
    """
    TN, Np = _split_dim(N, _TN_CAP)
    per_w = _W_TILE_BUDGET // (2 * n_weights)            # bytes per weight tile
    tk_cap = max(128, (per_w // (TN * 2)) // 128 * 128)  # bf16 => 2 bytes/elem
    TK, Kp = _split_dim(K, tk_cap)
    return TK, Kp, TN, Np


def _pick_m_tile(m):
    mp = _ceil_to(max(m, 1), 8)
    if mp <= 256:
        return mp, mp
    return 256, _ceil_to(m, 256)


def _erf_approx(x):
    # Abramowitz & Stegun 7.1.26 (max abs err ~1.5e-7: f32-exact).
    a1, a2, a3, a4, a5 = (0.254829592, -0.284496736, 1.421413741,
                          -1.453152027, 1.061405429)
    p = 0.3275911
    s = jnp.where(x >= 0.0, 1.0, -1.0)
    ax = jnp.abs(x)
    t = 1.0 / (1.0 + p * ax)
    poly = ((((a5 * t + a4) * t + a3) * t + a2) * t + a1) * t
    return s * (1.0 - poly * jnp.exp(-ax * ax))


def _gelu_erf(x):
    return 0.5 * x * (1.0 + _erf_approx(x * 0.7071067811865476))


# ---------------------------------------------------------------------------
# Pallas kernels
# ---------------------------------------------------------------------------
def _matmul_kernel(a_ref, b_ref, bias_ref, o_ref, acc_ref, *, act):
    k = pl.program_id(2)

    @pl.when(k == 0)
    def _():
        acc_ref[...] = jnp.zeros_like(acc_ref)

    acc_ref[...] += jnp.dot(a_ref[...], b_ref[...],
                            preferred_element_type=jnp.float32)

    @pl.when(k == pl.num_programs(2) - 1)
    def _():
        r = acc_ref[...] + bias_ref[...]
        if act == "silu":
            r = r * jax.nn.sigmoid(r)
        o_ref[...] = r.astype(o_ref.dtype)


@functools.partial(jax.jit, static_argnames=("act", "out_dtype"))
def matmul_bias_act(a, w, b, act="none", out_dtype=jnp.float32):
    """act(a @ w + b).  a: (M, K) f32/bf16; w: (Kp, Np) pre-padded bf16;
    b: (N,) f32.  Weights are never re-padded/re-cast here."""
    M, K = a.shape
    N = b.shape[0]
    TK, Kp, TN, Np = _plan_gemm(K, N, n_weights=1)
    assert w.shape == (Kp, Np), (w.shape, (Kp, Np))
    TM, Mp = _pick_m_tile(M)
    a_p = a.astype(jnp.bfloat16)
    if (Mp, Kp) != (M, K):
        a_p = jnp.pad(a_p, ((0, Mp - M), (0, Kp - K)))
    b_p = jnp.pad(b.astype(jnp.float32), (0, Np - N)).reshape(1, Np)
    # TODO(synk): with 1-3 K steps per GEMM a 3-deep weight pipeline
    # (pipeline_mode=pl.Buffered(3)) could hide the warm-up DMA bubble.
    out = pl.pallas_call(
        functools.partial(_matmul_kernel, act=act),
        out_shape=jax.ShapeDtypeStruct((Mp, Np), out_dtype),
        grid_spec=pltpu.PrefetchScalarGridSpec(
            num_scalar_prefetch=0,
            grid=(Mp // TM, Np // TN, Kp // TK),
            in_specs=[
                pl.BlockSpec((TM, TK), lambda i, j, k: (i, k)),
                pl.BlockSpec((TK, TN), lambda i, j, k: (k, j)),
                pl.BlockSpec((1, TN), lambda i, j, k: (0, j)),
            ],
            out_specs=pl.BlockSpec((TM, TN), lambda i, j, k: (i, j)),
            scratch_shapes=[pltpu.VMEM((TM, TN), jnp.float32)],
        ),
        compiler_params=pltpu.CompilerParams(
            dimension_semantics=("parallel", "parallel", "arbitrary"),
            vmem_limit_bytes=_VMEM_LIMIT),
    )(a_p, w, b_p)
    return out[:M, :N]


def _geglu_kernel(a_ref, wx_ref, wg_ref, bx_ref, bg_ref, o_ref,
                  accx_ref, accg_ref):
    k = pl.program_id(2)

    @pl.when(k == 0)
    def _():
        accx_ref[...] = jnp.zeros_like(accx_ref)
        accg_ref[...] = jnp.zeros_like(accg_ref)

    a = a_ref[...]
    accx_ref[...] += jnp.dot(a, wx_ref[...], preferred_element_type=jnp.float32)
    accg_ref[...] += jnp.dot(a, wg_ref[...], preferred_element_type=jnp.float32)

    @pl.when(k == pl.num_programs(2) - 1)
    def _():
        gx = accx_ref[...] + bx_ref[...]
        gg = accg_ref[...] + bg_ref[...]
        o_ref[...] = (gx * _gelu_erf(gg)).astype(o_ref.dtype)


@jax.jit
def matmul_geglu(a, wx, wg, bx, bg):
    """(a @ wx + bx) * gelu(a @ wg + bg) fused in one kernel (bf16 output)."""
    M, K = a.shape
    N = bx.shape[0]
    TK, Kp, TN, Np = _plan_gemm(K, N, n_weights=2)
    assert wx.shape == (Kp, Np) and wg.shape == (Kp, Np)
    TM, Mp = _pick_m_tile(M)
    a_p = a.astype(jnp.bfloat16)
    if (Mp, Kp) != (M, K):
        a_p = jnp.pad(a_p, ((0, Mp - M), (0, Kp - K)))
    bx_p = jnp.pad(bx.astype(jnp.float32), (0, Np - N)).reshape(1, Np)
    bg_p = jnp.pad(bg.astype(jnp.float32), (0, Np - N)).reshape(1, Np)
    out = pl.pallas_call(
        _geglu_kernel,
        out_shape=jax.ShapeDtypeStruct((Mp, Np), jnp.bfloat16),
        grid_spec=pltpu.PrefetchScalarGridSpec(
            num_scalar_prefetch=0,
            grid=(Mp // TM, Np // TN, Kp // TK),
            in_specs=[
                pl.BlockSpec((TM, TK), lambda i, j, k: (i, k)),
                pl.BlockSpec((TK, TN), lambda i, j, k: (k, j)),
                pl.BlockSpec((TK, TN), lambda i, j, k: (k, j)),
                pl.BlockSpec((1, TN), lambda i, j, k: (0, j)),
                pl.BlockSpec((1, TN), lambda i, j, k: (0, j)),
            ],
            out_specs=pl.BlockSpec((TM, TN), lambda i, j, k: (i, j)),
            scratch_shapes=[pltpu.VMEM((TM, TN), jnp.float32),
                            pltpu.VMEM((TM, TN), jnp.float32)],
        ),
        compiler_params=pltpu.CompilerParams(
            dimension_semantics=("parallel", "parallel", "arbitrary"),
            vmem_limit_bytes=_VMEM_LIMIT),
    )(a_p, wx, wg, bx_p, bg_p)
    return out[:M, :N]


def _groupnorm_kernel(x_ref, w_ref, b_ref, o_ref, *, eps, act, groups,
                      inv_count):
    x = x_ref[0]                                    # (N_tokens, C) f32
    C = x.shape[-1]
    cg = C // groups
    ch_sum = jnp.sum(x, axis=0, keepdims=True)      # (1, C)
    ch_sq = jnp.sum(x * x, axis=0, keepdims=True)   # (1, C)
    # Group-indicator matrices generated in-kernel (no HBM side inputs).
    ch_i = jax.lax.broadcasted_iota(jnp.int32, (C, groups), 0) // cg
    g_i = jax.lax.broadcasted_iota(jnp.int32, (C, groups), 1)
    gmat = (ch_i == g_i).astype(jnp.float32)        # (C, G)
    ch_i_t = jax.lax.broadcasted_iota(jnp.int32, (groups, C), 1) // cg
    g_i_t = jax.lax.broadcasted_iota(jnp.int32, (groups, C), 0)
    gmat_t = (ch_i_t == g_i_t).astype(jnp.float32)  # (G, C)
    grp_mean = jnp.dot(ch_sum, gmat,
                       preferred_element_type=jnp.float32) * inv_count  # (1,G)
    grp_msq = jnp.dot(ch_sq, gmat,
                      preferred_element_type=jnp.float32) * inv_count
    grp_var = jnp.maximum(grp_msq - grp_mean * grp_mean, 0.0)
    mean_c = jnp.dot(grp_mean, gmat_t, preferred_element_type=jnp.float32)
    var_c = jnp.dot(grp_var, gmat_t, preferred_element_type=jnp.float32)
    y = (x - mean_c) * jax.lax.rsqrt(var_c + eps)
    y = y * w_ref[...] + b_ref[...]
    if act == "silu":
        y = y * jax.nn.sigmoid(y)
    o_ref[0] = y


@functools.partial(jax.jit, static_argnames=("eps", "act"))
def groupnorm(x_tok, weight, bias, eps, act="none"):
    """GroupNorm(32 groups) over (B, N_tokens, C), optional fused SiLU."""
    B, N, C = x_tok.shape
    G = 32
    # TODO(synk): stats need all tokens so this stays one block per batch item;
    # on v7x this (tiny) kernel therefore uses a single TensorCore.
    return pl.pallas_call(
        functools.partial(_groupnorm_kernel, eps=eps, act=act, groups=G,
                          inv_count=1.0 / float(N * (C // G))),
        out_shape=jax.ShapeDtypeStruct((B, N, C), jnp.float32),
        grid=(B,),
        in_specs=[
            pl.BlockSpec((1, N, C), lambda b: (b, 0, 0)),
            pl.BlockSpec((1, C), lambda b: (0, 0)),
            pl.BlockSpec((1, C), lambda b: (0, 0)),
        ],
        out_specs=pl.BlockSpec((1, N, C), lambda b: (b, 0, 0)),
        compiler_params=pltpu.CompilerParams(
            dimension_semantics=("parallel",),
            vmem_limit_bytes=_VMEM_LIMIT),
    )(x_tok, weight.reshape(1, C), bias.reshape(1, C))


def _layernorm_kernel(x_ref, w_ref, b_ref, o_ref, *, eps):
    x = x_ref[...]                                  # (TR, C)
    mean = jnp.mean(x, axis=-1, keepdims=True)
    var = jnp.maximum(jnp.mean(x * x, axis=-1, keepdims=True) - mean * mean,
                      0.0)
    y = (x - mean) * jax.lax.rsqrt(var + eps)
    o_ref[...] = y * w_ref[...] + b_ref[...]


@functools.partial(jax.jit, static_argnames=("eps",))
def layernorm(x, weight, bias, eps=1e-5):
    B, S, C = x.shape
    R = B * S
    TR = 256 if R >= 256 else _ceil_to(R, 8)
    Rp = _ceil_to(R, TR)
    x2 = jnp.pad(x.reshape(R, C), ((0, Rp - R), (0, 0)))
    out = pl.pallas_call(
        functools.partial(_layernorm_kernel, eps=eps),
        out_shape=jax.ShapeDtypeStruct((Rp, C), jnp.float32),
        grid=(Rp // TR,),
        in_specs=[
            pl.BlockSpec((TR, C), lambda r: (r, 0)),
            pl.BlockSpec((1, C), lambda r: (0, 0)),
            pl.BlockSpec((1, C), lambda r: (0, 0)),
        ],
        out_specs=pl.BlockSpec((TR, C), lambda r: (r, 0)),
        compiler_params=pltpu.CompilerParams(
            dimension_semantics=("parallel",),
            vmem_limit_bytes=_VMEM_LIMIT),
    )(x2, weight.reshape(1, C), bias.reshape(1, C))
    return out[:R].reshape(B, S, C)


def _attention_kernel(q_ref, k_ref, v_ref, o_ref, *, scale, skv, skv_p):
    q = q_ref[0]          # (H, TQ, Dh)   bf16
    k = k_ref[0]          # (H, Skv_p, Dh) bf16
    v = v_ref[0]          # (H, Skv_p, Dh) bf16
    s = jnp.einsum('hqd,hkd->hqk', q, k,
                   preferred_element_type=jnp.float32) * scale
    if skv_p != skv:      # mask padded key positions
        kv_idx = jax.lax.broadcasted_iota(jnp.int32, s.shape, 2)
        s = jnp.where(kv_idx < skv, s, -1e30)
    m = jnp.max(s, axis=-1, keepdims=True)
    p = jnp.exp(s - m)
    p = p * pl.reciprocal(jnp.sum(p, axis=-1, keepdims=True), approx=True)
    o_ref[0] = jnp.einsum('hqk,hkd->hqd', p.astype(v.dtype), v,
                          preferred_element_type=jnp.float32).astype(o_ref.dtype)


@jax.jit
def attention(q, k, v):
    """q: (B, H, Sq, Dh) bf16; k/v: (B, H, Skv, Dh) bf16 -> (B, H, Sq, Dh) bf16.

    All heads of a batch element are processed per grid step; the head dim is
    kept un-padded in HBM (it is the full trailing block dim).  MXU dots run
    with bf16 operands; softmax statistics stay f32.
    """
    B, H, Sq, Dh = q.shape
    Skv = k.shape[2]
    Skv_p = _ceil_to(Skv, 8)
    # Cap TQ so the (H, TQ, Skv_p) f32 score block stays around <=8 MiB.
    tq_cap = max(8, ((8 * 1024 * 1024) // (H * Skv_p * 4)) // 8 * 8)
    TQ = min(_ceil_to(Sq, 8), tq_cap)
    Sq_p = _ceil_to(Sq, TQ)
    q_p = q if Sq_p == Sq else jnp.pad(q, ((0, 0), (0, 0), (0, Sq_p - Sq),
                                           (0, 0)))
    if Skv_p != Skv:
        k = jnp.pad(k, ((0, 0), (0, 0), (0, Skv_p - Skv), (0, 0)))
        v = jnp.pad(v, ((0, 0), (0, 0), (0, Skv_p - Skv), (0, 0)))
    scale = 1.0 / math.sqrt(Dh)
    out = pl.pallas_call(
        functools.partial(_attention_kernel, scale=scale, skv=Skv,
                          skv_p=Skv_p),
        out_shape=jax.ShapeDtypeStruct((B, H, Sq_p, Dh), jnp.bfloat16),
        grid=(B, Sq_p // TQ),
        in_specs=[
            pl.BlockSpec((1, H, TQ, Dh), lambda b, t: (b, 0, t, 0)),
            pl.BlockSpec((1, H, Skv_p, Dh), lambda b, t: (b, 0, 0, 0)),
            pl.BlockSpec((1, H, Skv_p, Dh), lambda b, t: (b, 0, 0, 0)),
        ],
        out_specs=pl.BlockSpec((1, H, TQ, Dh), lambda b, t: (b, 0, t, 0)),
        compiler_params=pltpu.CompilerParams(
            dimension_semantics=("parallel", "parallel"),
            vmem_limit_bytes=_VMEM_LIMIT),
    )(q_p, k, v)
    return out[:, :, :Sq, :]


# ---------------------------------------------------------------------------
# Layer forward functions (glue around the Pallas kernels)
# ---------------------------------------------------------------------------
def conv2d(x, p, kernel, stride=1, padding=0):
    """x: (B, H, W, Cin); p['w']: pre-padded (Kp, Np) bf16 matrix of the
    (kh*kw*Cin, Cout) conv weight; p['b']: (Cout,) f32."""
    B, H, W, cin = x.shape
    cout = p["b"].shape[0]
    if kernel == 1:
        y = matmul_bias_act(x.reshape(B * H * W, cin), p["w"], p["b"])
        return y.reshape(B, H, W, cout)
    # TODO(synk): the 3x3 taps could be folded into the matmul K grid axis with
    # shifted index_maps to avoid materializing im2col patches entirely; here
    # the patches are built once in bf16 (half the old f32 HBM round trip).
    xb = x.astype(jnp.bfloat16)
    xp = jnp.pad(xb, ((0, 0), (padding, padding), (padding, padding), (0, 0)))
    Ho = (H + 2 * padding - kernel) // stride + 1
    Wo = (W + 2 * padding - kernel) // stride + 1
    cols = []
    for i in range(kernel):
        for j in range(kernel):
            cols.append(xp[:, i:i + stride * (Ho - 1) + 1:stride,
                           j:j + stride * (Wo - 1) + 1:stride, :])
    patches = jnp.concatenate(cols, axis=-1)        # (B, Ho, Wo, k*k*Cin) bf16
    y = matmul_bias_act(patches.reshape(B * Ho * Wo, kernel * kernel * cin),
                        p["w"], p["b"])
    return y.reshape(B, Ho, Wo, cout)


def _split_heads(t, B, S, n_heads):
    C = t.shape[-1]
    dh = C // n_heads
    return t.reshape(B, S, n_heads, dh).transpose(0, 2, 1, 3)   # (B,H,S,dh)


def _merge_heads(t, B, S, n_heads):
    return t.transpose(0, 2, 1, 3).reshape(B * S, -1)


def self_attention(x, p, n_heads):
    B, S, C = x.shape
    qkv = matmul_bias_act(x.reshape(B * S, C), p["in_proj"]["w"],
                          p["in_proj"]["b"], out_dtype=jnp.bfloat16)
    q, k, v = jnp.split(qkv, 3, axis=-1)
    o = attention(_split_heads(q, B, S, n_heads),
                  _split_heads(k, B, S, n_heads),
                  _split_heads(v, B, S, n_heads))
    o = _merge_heads(o, B, S, n_heads)
    o = matmul_bias_act(o, p["out_proj"]["w"], p["out_proj"]["b"])
    return o.reshape(B, S, C)


def cross_attention(x, context, p, n_heads):
    B, S, C = x.shape
    _, Skv, Dc = context.shape
    q = matmul_bias_act(x.reshape(B * S, C), p["q"]["w"], p["q"]["b"],
                        out_dtype=jnp.bfloat16)
    k = matmul_bias_act(context.reshape(B * Skv, Dc), p["k"]["w"], p["k"]["b"],
                        out_dtype=jnp.bfloat16)
    v = matmul_bias_act(context.reshape(B * Skv, Dc), p["v"]["w"], p["v"]["b"],
                        out_dtype=jnp.bfloat16)
    o = attention(_split_heads(q, B, S, n_heads),
                  _split_heads(k, B, Skv, n_heads),
                  _split_heads(v, B, Skv, n_heads))
    o = _merge_heads(o, B, S, n_heads)
    o = matmul_bias_act(o, p["out_proj"]["w"], p["out_proj"]["b"])
    return o.reshape(B, S, C)


def residual_block(x, t_proj, p):
    """t_proj: (1, Cout) pre-computed linear_time(silu(time_embed)) slice."""
    B, H, W, Cin = x.shape
    residual = x
    h = groupnorm(x.reshape(B, H * W, Cin), p["gn_f"]["w"], p["gn_f"]["b"],
                  eps=1e-5, act="silu")
    h = conv2d(h.reshape(B, H, W, Cin), p["conv_f"], kernel=3, stride=1,
               padding=1)
    Cout = h.shape[-1]
    h = h + t_proj[:, None, None, :]
    m = groupnorm(h.reshape(B, H * W, Cout), p["gn_m"]["w"], p["gn_m"]["b"],
                  eps=1e-5, act="silu")
    m = conv2d(m.reshape(B, H, W, Cout), p["conv_m"], kernel=3, stride=1,
               padding=1)
    if p["res_conv"] is None:
        r = residual
    else:
        r = conv2d(residual, p["res_conv"], kernel=1, stride=1, padding=0)
    return r + m


def attention_block(x, context, p, n_heads=8):
    B, H, W, C = x.shape
    final_residual = x
    h = groupnorm(x.reshape(B, H * W, C), p["gn"]["w"], p["gn"]["b"],
                  eps=1e-6, act="none")
    h = conv2d(h.reshape(B, H, W, C), p["conv_in"], kernel=1)
    t = h.reshape(B, H * W, C)

    res = t
    t = self_attention(layernorm(t, p["ln1"]["w"], p["ln1"]["b"]),
                       p["attn1"], n_heads) + res
    res = t
    t = cross_attention(layernorm(t, p["ln2"]["w"], p["ln2"]["b"]), context,
                        p["attn2"], n_heads) + res
    res = t
    tn = layernorm(t, p["ln3"]["w"], p["ln3"]["b"]).reshape(B * H * W, C)
    gg = matmul_geglu(tn, p["geglu_x"]["w"], p["geglu_g"]["w"],
                      p["geglu_x"]["b"], p["geglu_g"]["b"])          # bf16
    t = matmul_bias_act(gg, p["geglu2"]["w"],
                        p["geglu2"]["b"]).reshape(B, H * W, C) + res

    out = conv2d(t.reshape(B, H, W, C), p["conv_out"], kernel=1)
    return final_residual + out


def upsample(x, p):
    x = jnp.repeat(jnp.repeat(x, 2, axis=1), 2, axis=2)   # nearest, scale 2
    return conv2d(x, p, kernel=3, stride=1, padding=1)


# ---------------------------------------------------------------------------
# Architecture description (static) + parameter construction (synthetic)
# ---------------------------------------------------------------------------
UNET_ARCH = {
    "encoders": [
        [("conv", 4, 320, 1)],
        [("res", 320, 320), ("attn", 8, 40)],
        [("res", 320, 320), ("attn", 8, 40)],
        [("conv", 320, 320, 2)],
        [("res", 320, 640), ("attn", 8, 80)],
        [("res", 640, 640), ("attn", 8, 80)],
        [("conv", 640, 640, 2)],
        [("res", 640, 1280), ("attn", 8, 160)],
        [("res", 1280, 1280), ("attn", 8, 160)],
        [("conv", 1280, 1280, 2)],
        [("res", 1280, 1280)],
        [("res", 1280, 1280)],
    ],
    "bottleneck": [("res", 1280, 1280), ("attn", 8, 160), ("res", 1280, 1280)],
    "decoders": [
        [("res", 2560, 1280)],
        [("res", 2560, 1280)],
        [("res", 2560, 1280), ("up", 1280)],
        [("res", 2560, 1280), ("attn", 8, 160)],
        [("res", 2560, 1280), ("attn", 8, 160)],
        [("res", 1920, 1280), ("attn", 8, 160), ("up", 1280)],
        [("res", 1920, 640), ("attn", 8, 80)],
        [("res", 1280, 640), ("attn", 8, 80)],
        [("res", 960, 640), ("attn", 8, 80), ("up", 640)],
        [("res", 960, 320), ("attn", 8, 40)],
        [("res", 640, 320), ("attn", 8, 40)],
        [("res", 640, 320), ("attn", 8, 40)],
    ],
}


def _res_block_couts():
    couts = []
    for seq in UNET_ARCH["encoders"]:
        couts += [d[2] for d in seq if d[0] == "res"]
    couts += [d[2] for d in UNET_ARCH["bottleneck"] if d[0] == "res"]
    for seq in UNET_ARCH["decoders"]:
        couts += [d[2] for d in seq if d[0] == "res"]
    return couts


_RES_COUTS = _res_block_couts()
_RES_OFFSETS = [0]
for _c in _RES_COUTS:
    _RES_OFFSETS.append(_RES_OFFSETS[-1] + _c)


class ParamGen:
    def __init__(self, key):
        self._key = key
        self._n = 0

    def normal(self, shape, scale=0.02):
        self._n += 1
        k = jax.random.fold_in(self._key, self._n)
        return scale * jax.random.normal(k, shape, dtype=jnp.float32)


def _pack_dense(w, b, n_weights=1):
    """Pad the (K, N) weight ONCE to the call-time tile plan and cast to bf16."""
    K, N = w.shape
    _, Kp, _, Np = _plan_gemm(K, N, n_weights)
    wp = jnp.pad(w, ((0, Kp - K), (0, Np - N))).astype(jnp.bfloat16)
    return {"w": wp, "b": b.astype(jnp.float32)}


def make_params(key):
    pg = ParamGen(key)

    def dense(cin, cout, bias=True, n_weights=1):
        b = pg.normal((cout,)) if bias else jnp.zeros((cout,), jnp.float32)
        return _pack_dense(pg.normal((cin, cout)), b, n_weights)

    def conv(cin, cout, k):
        w = pg.normal((k, k, cin, cout)).reshape(k * k * cin, cout)
        return _pack_dense(w, pg.normal((cout,)))

    def norm(c):
        return {"w": 1.0 + pg.normal((c,), 0.01), "b": pg.normal((c,), 0.01)}

    def res(cin, cout):
        # linear_time weights live in the fused params["time_proj"] GEMM.
        return {"gn_f": norm(cin), "conv_f": conv(cin, cout, 3),
                "gn_m": norm(cout), "conv_m": conv(cout, cout, 3),
                "res_conv": None if cin == cout else conv(cin, cout, 1)}

    def attn(n_heads, d_embed, d_context=768):
        c = n_heads * d_embed
        return {"gn": norm(c), "conv_in": conv(c, c, 1),
                "ln1": norm(c),
                "attn1": {"in_proj": dense(c, 3 * c, bias=False),
                          "out_proj": dense(c, c)},
                "ln2": norm(c),
                "attn2": {"q": dense(c, c, bias=False),
                          "k": dense(d_context, c, bias=False),
                          "v": dense(d_context, c, bias=False),
                          "out_proj": dense(c, c)},
                "ln3": norm(c),
                "geglu_x": dense(c, 4 * c, n_weights=2),
                "geglu_g": dense(c, 4 * c, n_weights=2),
                "geglu2": dense(4 * c, c), "conv_out": conv(c, c, 1)}

    def layer_params(desc):
        kind = desc[0]
        if kind == "conv":
            return conv(desc[1], desc[2], 3)
        if kind == "res":
            return res(desc[1], desc[2])
        if kind == "attn":
            return attn(desc[1], desc[2])
        if kind == "up":
            return conv(desc[1], desc[1], 3)
        raise ValueError(kind)

    unet = {
        "encoders": [[layer_params(d) for d in seq]
                     for seq in UNET_ARCH["encoders"]],
        "bottleneck": [layer_params(d) for d in UNET_ARCH["bottleneck"]],
        "decoders": [[layer_params(d) for d in seq]
                     for seq in UNET_ARCH["decoders"]],
    }
    total_cout = sum(_RES_COUTS)
    return {
        "time_embedding": {"linear_1": dense(320, 1280),
                           "linear_2": dense(1280, 1280)},
        # All per-res-block linear_time (1280 -> Cout) weights concatenated
        # along N: computed by a single GEMM per forward pass.
        "time_proj": dense(1280, total_cout),
        "unet": unet,
        "final": {"gn": norm(320), "conv": conv(320, 4, 3)},
    }


# ---------------------------------------------------------------------------
# Full Diffusion forward (single jit over the whole graph)
# ---------------------------------------------------------------------------
@jax.jit
def diffusion_forward(params, latent_nchw, context, time):
    # Time embedding: linear(320->1280) + SiLU + linear(1280->1280)
    te = params["time_embedding"]
    t = matmul_bias_act(time, te["linear_1"]["w"], te["linear_1"]["b"],
                        act="silu")
    t = matmul_bias_act(t, te["linear_2"]["w"], te["linear_2"]["b"])
    time_silu = jax.nn.silu(t)   # every residual block applies silu(time) first
    # Fused linear_time for ALL residual blocks (one weight-streaming GEMM).
    tp = params["time_proj"]
    time_all = matmul_bias_act(time_silu, tp["w"], tp["b"])   # (1, sum Couts)

    x = jnp.transpose(latent_nchw, (0, 2, 3, 1)).astype(jnp.float32)  # -> NHWC

    res_idx = [0]

    def apply_layer(desc, p, x):
        kind = desc[0]
        if kind == "conv":
            return conv2d(x, p, kernel=3, stride=desc[3], padding=1)
        if kind == "res":
            i = res_idx[0]
            res_idx[0] += 1
            off, cout = _RES_OFFSETS[i], _RES_COUTS[i]
            return residual_block(x, time_all[:, off:off + cout], p)
        if kind == "attn":
            return attention_block(x, context, p, n_heads=desc[1])
        if kind == "up":
            return upsample(x, p)
        raise ValueError(kind)

    skips = []
    for arch_seq, p_seq in zip(UNET_ARCH["encoders"],
                               params["unet"]["encoders"]):
        for desc, p in zip(arch_seq, p_seq):
            x = apply_layer(desc, p, x)
        skips.append(x)
    for desc, p in zip(UNET_ARCH["bottleneck"], params["unet"]["bottleneck"]):
        x = apply_layer(desc, p, x)
    for arch_seq, p_seq in zip(UNET_ARCH["decoders"],
                               params["unet"]["decoders"]):
        x = jnp.concatenate([x, skips.pop()], axis=-1)  # == torch.cat(dim=1)
        for desc, p in zip(arch_seq, p_seq):
            x = apply_layer(desc, p, x)

    # Final output layer: GroupNorm + SiLU + conv3x3 (320 -> 4)
    fin = params["final"]
    B, H, W, C = x.shape
    h = groupnorm(x.reshape(B, H * W, C), fin["gn"]["w"], fin["gn"]["b"],
                  eps=1e-5, act="silu")
    h = conv2d(h.reshape(B, H, W, C), fin["conv"], kernel=3, stride=1,
               padding=1)
    return jnp.transpose(h, (0, 3, 1, 2))               # NHWC -> NCHW


if __name__ == "__main__":
    key = jax.random.PRNGKey(0)
    pkey, xkey, ckey, tkey = jax.random.split(key, 4)

    params = make_params(pkey)

    B, H, W = 1, 16, 16
    latent = jax.random.normal(xkey, (B, 4, H, W), dtype=jnp.float32)   # NCHW
    context = jax.random.normal(ckey, (B, 8, 768), dtype=jnp.float32)   # (B,S,768)
    time = jax.random.normal(tkey, (1, 320), dtype=jnp.float32)         # (1,320)

    out = diffusion_forward(params, latent, context, time)
    out = jax.block_until_ready(out)
    assert out.shape == (B, 4, H, W), out.shape
    assert bool(jnp.all(jnp.isfinite(out)))
    print("KERNEL_OK")
</pallas_src>

<mosaic_0001>
module attributes {stable_mosaic.version = 11 : i64} {
  func.func @_matmul_kernel(%arg0: i32, %arg1: i32, %arg2: i32, %arg3: memref<8x384xbf16, #tpu.memory_space<vmem>>, %arg4: memref<384x1280xbf16, #tpu.memory_space<vmem>>, %arg5: memref<1x1280xf32, #tpu.memory_space<vmem>>, %arg6: memref<8x1280xf32, #tpu.memory_space<vmem>>, %arg7: memref<8x1280xf32, #tpu.memory_space<vmem>>) attributes {dimension_semantics = [#tpu.dimension_semantics<parallel>, #tpu.dimension_semantics<parallel>, #tpu.dimension_semantics<arbitrary>], iteration_bounds = array<i64: 1, 1, 1>, scalar_prefetch = 0 : i64, scratch_operands = 1 : i64, tpu.core_type = #tpu.core_type<tc>, window_params = [{transform_indices = @transform_0, window_bounds = array<i64: 8, 384>}, {transform_indices = @transform_1, window_bounds = array<i64: 384, 1280>}, {transform_indices = @transform_2, window_bounds = array<i64: 1, 1280>}, {transform_indices = @transform_3, window_bounds = array<i64: 8, 1280>}]} {
    %c0_i32 = arith.constant 0 : i32
    %0 = arith.cmpi eq, %arg2, %c0_i32 : i32
    %1 = arith.extui %0 : i1 to i32
    %c0_i32_0 = arith.constant 0 : i32
    %2 = arith.cmpi ne, %1, %c0_i32_0 : i32
    scf.if %2 {
      %cst_10 = arith.constant 0.000000e+00 : f32
      %12 = vector.broadcast %cst_10 : f32 to vector<8x1280xf32>
      %c0_11 = arith.constant 0 : index
      %c0_12 = arith.constant 0 : index
      %13 = vector.load %arg7[%c0_11, %c0_12] : memref<8x1280xf32, #tpu.memory_space<vmem>>, vector<8x1280xf32>
      tpu.vector_store %arg7[%c0_11, %c0_12], %12 {strides = array<i32>} : memref<8x1280xf32, #tpu.memory_space<vmem>>, vector<8x1280xf32>,
    } else {
    }
    %c0 = arith.constant 0 : index
    %c0_1 = arith.constant 0 : index
    %3 = vector.load %arg7[%c0, %c0_1] : memref<8x1280xf32, #tpu.memory_space<vmem>>, vector<8x1280xf32>
    %c0_2 = arith.constant 0 : index
    %c0_3 = arith.constant 0 : index
    %4 = vector.load %arg3[%c0_2, %c0_3] : memref<8x384xbf16, #tpu.memory_space<vmem>>, vector<8x384xbf16>
    %c0_4 = arith.constant 0 : index
    %c0_5 = arith.constant 0 : index
    %5 = vector.load %arg4[%c0_4, %c0_5] : memref<384x1280xbf16, #tpu.memory_space<vmem>>, vector<384x1280xbf16>
    %cst = arith.constant dense<0.000000e+00> : vector<8x1280xf32>
    %6 = tpu.matmul %4, %5, %cst {dimension_numbers = #tpu.dot_dimension_numbers<[1], [0], [0], [1], [0, 0, 1, 1], [], []>} : vector<8x384xbf16>, vector<384x1280xbf16>, vector<8x1280xf32> -> vector<8x1280xf32>
    %7 = arith.addf %3, %6 : vector<8x1280xf32>
    %c0_6 = arith.constant 0 : index
    %c0_7 = arith.constant 0 : index
    %8 = vector.load %arg7[%c0_6, %c0_7] : memref<8x1280xf32, #tpu.memory_space<vmem>>, vector<8x1280xf32>
    tpu.vector_store %arg7[%c0_6, %c0_7], %7 {strides = array<i32>} : memref<8x1280xf32, #tpu.memory_space<vmem>>, vector<8x1280xf32>,
    %c0_i32_8 = arith.constant 0 : i32
    %9 = arith.cmpi eq, %arg2, %c0_i32_8 : i32
    %10 = arith.extui %9 : i1 to i32
    %c0_i32_9 = arith.constant 0 : i32
    %11 = arith.cmpi ne, %10, %c0_i32_9 : i32
    scf.if %11 {
      %c0_10 = arith.constant 0 : index
      %c0_11 = arith.constant 0 : index
      %12 = vector.load %arg7[%c0_10, %c0_11] : memref<8x1280xf32, #tpu.memory_space<vmem>>, vector<8x1280xf32>
      %c0_12 = arith.constant 0 : index
      %c0_13 = arith.constant 0 : index
      %13 = vector.load %arg5[%c0_12, %c0_13] : memref<1x1280xf32, #tpu.memory_space<vmem>>, vector<1x1280xf32>
      %14 = vector.broadcast %13 : vector<1x1280xf32> to vector<8x1280xf32>
      %15 = arith.addf %12, %14 : vector<8x1280xf32>
      %16 = arith.negf %15 : vector<8x1280xf32>
      %17 = math.exp %16 : vector<8x1280xf32>
      %cst_14 = arith.constant 1.000000e+00 : f32
      %18 = vector.broadcast %cst_14 : f32 to vector<8x1280xf32>
      %19 = arith.addf %18, %17 : vector<8x1280xf32>
      %20 = arith.divf %18, %19 : vector<8x1280xf32>
      %21 = arith.mulf %15, %20 : vector<8x1280xf32>
      %c0_15 = arith.constant 0 : index
      %c0_16 = arith.constant 0 : index
      %22 = vector.load %arg6[%c0_15, %c0_16] : memref<8x1280xf32, #tpu.memory_space<vmem>>, vector<8x1280xf32>
      tpu.vector_store %arg6[%c0_15, %c0_16], %21 {strides = array<i32>} : memref<8x1280xf32, #tpu.memory_space<vmem>>, vector<8x1280xf32>,
    } else {
    }
    return
  }
  func.func @transform_0(%arg0: i32, %arg1: i32, %arg2: i32) -> (i32, i32) {
    %c0_i32 = arith.constant 0 : i32
    return %arg0, %arg2 : i32, i32
  }
  func.func @transform_1(%arg0: i32, %arg1: i32, %arg2: i32) -> (i32, i32) {
    %c0_i32 = arith.constant 0 : i32
    return %arg2, %arg1 : i32, i32
  }
  func.func @transform_2(%arg0: i32, %arg1: i32, %arg2: i32) -> (i32, i32) {
    %c0_i32 = arith.constant 0 : i32
    %c0_i32_0 = arith.constant 0 : i32
    return %c0_i32, %arg1 : i32, i32
  }
  func.func @transform_3(%arg0: i32, %arg1: i32, %arg2: i32) -> (i32, i32) {
    %c0_i32 = arith.constant 0 : i32
    return %arg0, %arg1 : i32, i32
  }
}

</mosaic_0001>

<llo_original>
// kernel: matmul_bias_act.1
$region0: #{matmul_bias_act.1}
  #allocation0 [shape = 'u32[]', space=smem, size = 0x4, offset = 0x4, fixed_abs, tag = 'smem constant byte address 0x4 - core index']
  #allocation1 [shape = 'u32[72,128]{1,0:T(1,128)}', space=vmem, size = 0x9000, scoped, tag = 'internal scratch']
  #allocation2 [shape = 'f32[8,1280]{1,0:T(8,128)}', space=vmem, size = 0xa000, scoped, tag = 'scratch operand']
  %s0 = inlined_call_operand.vmem [shape: bf16[8,384], index: 0, kind: input, shape index: {}]
  %s1 = inlined_call_operand.hbm [shape: bf16[384,1280], index: 1, kind: input, shape index: {}]
  %s2 = inlined_call_operand.vmem [shape: f32[1,1280], index: 2, kind: input, shape index: {}]
  %s3 = inlined_call_operand.vmem [shape: f32[8,1280], index: 3, kind: output, shape index: {}]
  %s4 = sld [smem:[#allocation0]]
  $region34: #{matmul_bias_act.1} parent=0
    _
  %s6 = ssub.s32 1, %s4
  %s7 = scalar_select 0, %s6, %s4
  $region1: #{matmul_bias_act.1} parent=0
    #allocation3 [shape = 'u8[983040]{0}', space=vmem, size = 0xf0000, scoped, tag = 'input window, operand 1, single buffered']
    #allocation4 [shape = 's32[1]{0}', space=sflag, size = 0x4, scoped, tag = 'scoped memory for matmul_bias_act.1']
    %8 = vsyncpa [#allocation4], 0
    // Predicated region
    $region2: #{matmul_bias_act.1} parent=1 // pred_check
      _
    $region3: #{matmul_bias_act.1} parent=1 // pred_check_branch
      %10 = sbr.rel (0) target = $region5
    $region4: #{matmul_bias_act.1} parent=1 // pred_region
      _
    $region5: #{matmul_bias_act.1} parent=1 // pred_fallthru
      _
    // Predicated region
    $region6: #{matmul_bias_act.1} parent=1 // pred_check
      _
    $region7: #{matmul_bias_act.1} parent=1 // pred_check_branch
      %12 = sbr.rel (0) target = $region9
    $region8: #{matmul_bias_act.1} parent=1 // pred_region
      %14 = vsyncadd [#allocation4], 0
      %s15 = sshll.u32 %s1, 4
      %s16 = int_to_ptr.hbm [resolvable:$true] %s15
      %s17 = sshll.u32 [#allocation3], 4
      %s18 = int_to_ptr.vmem [resolvable:$true] %s17
      %23 = dma.hbm_to_vmem [thread:$0]  %s16, 30720, %s18, [#allocation4], 640, 640, 40
    $region9: #{matmul_bias_act.1} parent=1 // pred_fallthru
      _
    // Predicated region
    $region10: #{matmul_bias_act.1} parent=1 // pred_check
      _
    $region11: #{matmul_bias_act.1} parent=1 // pred_check_branch
      %25 = sbr.rel (0) target = $region13
    $region12: #{matmul_bias_act.1} parent=1 // pred_region
      _
    $region13: #{matmul_bias_act.1} parent=1 // pred_fallthru
      _
    // Predicated region
    $region14: #{matmul_bias_act.1} parent=1 // pred_check
      _
    $region15: #{matmul_bias_act.1} parent=1 // pred_check_branch
      %27 = sbr.rel (0) target = $region17
    $region16: #{matmul_bias_act.1} parent=1 // pred_region
      %29 = dma.done [#allocation4], 30720
    $region17: #{matmul_bias_act.1} parent=1 // pred_fallthru
      _
    %p30 = scmp.eq.s32.totalorder 0, 0
    // Predicated region
    $region18: #{matmul_bias_act.1} parent=1 // pred_check
      %p31 = pneg %p30
    $region19: #{matmul_bias_act.1} parent=1 // pred_check_branch
      %33 = sbr.rel (%p31) target = $region21
    $region20: #{matmul_bias_act.1} parent=1 // pred_region
      %34 = vst [vmem:[#allocation2] sm:$0xff] 0.0
      %35 = vst [vmem:[#allocation2 + $0x8] sm:$0xff] 0.0
      %36 = vst [vmem:[#allocation2 + $0x10] sm:$0xff] 0.0
      %37 = vst [vmem:[#allocation2 + $0x18] sm:$0xff] 0.0
      %38 = vst [vmem:[#allocation2 + $0x20] sm:$0xff] 0.0
      %39 = vst [vmem:[#allocation2 + $0x28] sm:$0xff] 0.0
      %40 = vst [vmem:[#allocation2 + $0x30] sm:$0xff] 0.0
      %41 = vst [vmem:[#allocation2 + $0x38] sm:$0xff] 0.0
      %42 = vst [vmem:[#allocation2 + $0x40] sm:$0xff] 0.0
      %43 = vst [vmem:[#allocation2 + $0x48] sm:$0xff] 0.0
    $region21: #{matmul_bias_act.1} parent=1 // pred_fallthru
      _
    %v44 = vld [vmem:[#allocation2] sm:$0xff]
    %v45 = vld [vmem:[#allocation2 + $0x8] sm:$0xff]
    %v46 = vld [vmem:[#allocation2 + $0x10] sm:$0xff]
    %v47 = vld [vmem:[#allocation2 + $0x18] sm:$0xff]
    %v48 = vld [vmem:[#allocation2 + $0x20] sm:$0xff]
    %v49 = vld [vmem:[#allocation2 + $0x28] sm:$0xff]
    %v50 = vld [vmem:[#allocation2 + $0x30] sm:$0xff]
    %v51 = vld [vmem:[#allocation2 + $0x38] sm:$0xff]
    %v52 = vld [vmem:[#allocation2 + $0x40] sm:$0xff]
    %v53 = vld [vmem:[#allocation2 + $0x48] sm:$0xff]
    %v54 = vld [vmem:[%s0] sm:$0xff]
    %v55 = vld [vmem:[%s0 + $0x8] sm:$0xf]
    %v56 = vld [vmem:[#allocation3] sm:$0xff]
    %v57 = vld [vmem:[#allocation3 + $0x8] sm:$0xff]
    %v58 = vld [vmem:[#allocation3 + $0x10] sm:$0xff]
    %v59 = vld [vmem:[#allocation3 + $0x18] sm:$0xff]
    %v60 = vld [vmem:[#allocation3 + $0x20] sm:$0xff]
    %v61 = vld [vmem:[#allocation3 + $0x28] sm:$0xff]
    %v62 = vld [vmem:[#allocation3 + $0x30] sm:$0xff]
    %v63 = vld [vmem:[#allocation3 + $0x38] sm:$0xff]
    %v64 = vld [vmem:[#allocation3 + $0x40] sm:$0xff]
    %v65 = vld [vmem:[#allocation3 + $0x48] sm:$0xff]
    %v66 = vld [vmem:[#allocation3 + $0x50] sm:$0xff]
    %v67 = vld [vmem:[#allocation3 + $0x58] sm:$0xff]
    %v68 = vld [vmem:[#allocation3 + $0x60] sm:$0xff]
    %v69 = vld [vmem:[#allocation3 + $0x68] sm:$0xff]
    %v70 = vld [vmem:[#allocation3 + $0x70] sm:$0xff]
    %v71 = vld [vmem:[#allocation3 + $0x78] sm:$0xff]
    %v72 = vld [vmem:[#allocation3 + $0x80] sm:$0xff]
    %v73 = vld [vmem:[#allocation3 + $0x88] sm:$0xff]
    %v74 = vld [vmem:[#allocation3 + $0x90] sm:$0xff]
    %v75 = vld [vmem:[#allocation3 + $0x98] sm:$0xff]
    %v76 = vld [vmem:[#allocation3 + $0xa0] sm:$0xff]
    %v77 = vld [vmem:[#allocation3 + $0xa8] sm:$0xff]
    %v78 = vld [vmem:[#allocation3 + $0xb0] sm:$0xff]
    %v79 = vld [vmem:[#allocation3 + $0xb8] sm:$0xff]
    %v80 = vld [vmem:[#allocation3 + $0xc0] sm:$0xff]
    %v81 = vld [vmem:[#allocation3 + $0xc8] sm:$0xff]
    %v82 = vld [vmem:[#allocation3 + $0xd0] sm:$0xff]
    %v83 = vld [vmem:[#allocation3 + $0xd8] sm:$0xff]
    %v84 = vld [vmem:[#allocation3 + $0xe0] sm:$0xff]
    %v85 = vld [vmem:[#allocation3 + $0xe8] sm:$0xff]
    %v86 = vld [vmem:[#allocation3 + $0xf0] sm:$0xff]
    %v87 = vld [vmem:[#allocation3 + $0xf8] sm:$0xff]
    %v88 = vld [vmem:[#allocation3 + $0x100] sm:$0xff]
    %v89 = vld [vmem:[#allocation3 + $0x108] sm:$0xff]
    %v90 = vld [vmem:[#allocation3 + $0x110] sm:$0xff]
    %v91 = vld [vmem:[#allocation3 + $0x118] sm:$0xff]
    %v92 = vld [vmem:[#allocation3 + $0x120] sm:$0xff]
    %v93 = vld [vmem:[#allocation3 + $0x128] sm:$0xff]
    %v94 = vld [vmem:[#allocation3 + $0x130] sm:$0xff]
    %v95 = vld [vmem:[#allocation3 + $0x138] sm:$0xff]
    %v96 = vld [vmem:[#allocation3 + $0x140] sm:$0xff]
    %v97 = vld [vmem:[#allocation3 + $0x148] sm:$0xff]
    %v98 = vld [vmem:[#allocation3 + $0x150] sm:$0xff]
    %v99 = vld [vmem:[#allocation3 + $0x158] sm:$0xff]
    %v100 = vld [vmem:[#allocation3 + $0x160] sm:$0xff]
    %v101 = vld [vmem:[#allocation3 + $0x168] sm:$0xff]
    %v102 = vld [vmem:[#allocation3 + $0x170] sm:$0xff]
    %v103 = vld [vmem:[#allocation3 + $0x178] sm:$0xff]
    %v104 = vld [vmem:[#allocation3 + $0x180] sm:$0xff]
    %v105 = vld [vmem:[#allocation3 + $0x188] sm:$0xff]
    %v106 = vld [vmem:[#allocation3 + $0x190] sm:$0xff]
    %v107 = vld [vmem:[#allocation3 + $0x198] sm:$0xff]
    %v108 = vld [vmem:[#allocation3 + $0x1a0] sm:$0xff]
    %v109 = vld [vmem:[#allocation3 + $0x1a8] sm:$0xff]
    %v110 = vld [vmem:[#allocation3 + $0x1b0] sm:$0xff]
    %v111 = vld [vmem:[#allocation3 + $0x1b8] sm:$0xff]
    %v112 = vld [vmem:[#allocation3 + $0x1c0] sm:$0xff]
    %v113 = vld [vmem:[#allocation3 + $0x1c8] sm:$0xff]
    %v114 = vld [vmem:[#allocation3 + $0x1d0] sm:$0xff]
    %v115 = vld [vmem:[#allocation3 + $0x1d8] sm:$0xff]
    %v116 = vld [vmem:[#allocation3 + $0x1e0] sm:$0xff]
    %v117 = vld [vmem:[#allocation3 + $0x1e8] sm:$0xff]
    %v118 = vld [vmem:[#allocation3 + $0x1f0] sm:$0xff]
    %v119 = vld [vmem:[#allocation3 + $0x1f8] sm:$0xff]
    %v120 = vld [vmem:[#allocation3 + $0x200] sm:$0xff]
    %v121 = vld [vmem:[#allocation3 + $0x208] sm:$0xff]
    %v122 = vld [vmem:[#allocation3 + $0x210] sm:$0xff]
    %v123 = vld [vmem:[#allocation3 + $0x218] sm:$0xff]
    %v124 = vld [vmem:[#allocation3 + $0x220] sm:$0xff]
    %v125 = vld [vmem:[#allocation3 + $0x228] sm:$0xff]
    %v126 = vld [vmem:[#allocation3 + $0x230] sm:$0xff]
    %v127 = vld [vmem:[#allocation3 + $0x238] sm:$0xff]
    %v128 = vld [vmem:[#allocation3 + $0x240] sm:$0xff]
    %v129 = vld [vmem:[#allocation3 + $0x248] sm:$0xff]
    %v130 = vld [vmem:[#allocation3 + $0x250] sm:$0xff]
    %v131 = vld [vmem:[#allocation3 + $0x258] sm:$0xff]
    %v132 = vld [vmem:[#allocation3 + $0x260] sm:$0xff]
    %v133 = vld [vmem:[#allocation3 + $0x268] sm:$0xff]
    %v134 = vld [vmem:[#allocation3 + $0x270] sm:$0xff]
    %v135 = vld [vmem:[#allocation3 + $0x278] sm:$0xff]
    %v136 = vld [vmem:[#allocation3 + $0x280] sm:$0xff]
    %v137 = vld [vmem:[#allocation3 + $0x288] sm:$0xff]
    %v138 = vld [vmem:[#allocation3 + $0x290] sm:$0xff]
    %v139 = vld [vmem:[#allocation3 + $0x298] sm:$0xff]
    %v140 = vld [vmem:[#allocation3 + $0x2a0] sm:$0xff]
    %v141 = vld [vmem:[#allocation3 + $0x2a8] sm:$0xff]
    %v142 = vld [vmem:[#allocation3 + $0x2b0] sm:$0xff]
    %v143 = vld [vmem:[#allocation3 + $0x2b8] sm:$0xff]
    %v144 = vld [vmem:[#allocation3 + $0x2c0] sm:$0xff]
    %v145 = vld [vmem:[#allocation3 + $0x2c8] sm:$0xff]
    %v146 = vld [vmem:[#allocation3 + $0x2d0] sm:$0xff]
    %v147 = vld [vmem:[#allocation3 + $0x2d8] sm:$0xff]
    %v148 = vld [vmem:[#allocation3 + $0x2e0] sm:$0xff]
    %v149 = vld [vmem:[#allocation3 + $0x2e8] sm:$0xff]
    %v150 = vld [vmem:[#allocation3 + $0x2f0] sm:$0xff]
    %v151 = vld [vmem:[#allocation3 + $0x2f8] sm:$0xff]
    %v152 = vld [vmem:[#allocation3 + $0x300] sm:$0xff]
    %v153 = vld [vmem:[#allocation3 + $0x308] sm:$0xff]
    %v154 = vld [vmem:[#allocation3 + $0x310] sm:$0xff]
    %v155 = vld [vmem:[#allocation3 + $0x318] sm:$0xff]
    %v156 = vld [vmem:[#allocation3 + $0x320] sm:$0xff]
    %v157 = vld [vmem:[#allocation3 + $0x328] sm:$0xff]
    %v158 = vld [vmem:[#allocation3 + $0x330] sm:$0xff]
    %v159 = vld [vmem:[#allocation3 + $0x338] sm:$0xff]
    %v160 = vld [vmem:[#allocation3 + $0x340] sm:$0xff]
    %v161 = vld [vmem:[#allocation3 + $0x348] sm:$0xff]
    %v162 = vld [vmem:[#allocation3 + $0x350] sm:$0xff]
    %v163 = vld [vmem:[#allocation3 + $0x358] sm:$0xff]
    %v164 = vld [vmem:[#allocation3 + $0x360] sm:$0xff]
    %v165 = vld [vmem:[#allocation3 + $0x368] sm:$0xff]
    %v166 = vld [vmem:[#allocation3 + $0x370] sm:$0xff]
    %v167 = vld [vmem:[#allocation3 + $0x378] sm:$0xff]
    %v168 = vld [vmem:[#allocation3 + $0x380] sm:$0xff]
    %v169 = vld [vmem:[#allocation3 + $0x388] sm:$0xff]
    %v170 = vld [vmem:[#allocation3 + $0x390] sm:$0xff]
    %v171 = vld [vmem:[#allocation3 + $0x398] sm:$0xff]
    %v172 = vld [vmem:[#allocation3 + $0x3a0] sm:$0xff]
    %v173 = vld [vmem:[#allocation3 + $0x3a8] sm:$0xff]
    %v174 = vld [vmem:[#allocation3 + $0x3b0] sm:$0xff]
    %v175 = vld [vmem:[#allocation3 + $0x3b8] sm:$0xff]
    %v176 = vld [vmem:[#allocation3 + $0x3c0] sm:$0xff]
    %v177 = vld [vmem:[#allocation3 + $0x3c8] sm:$0xff]
    %v178 = vld [vmem:[#allocation3 + $0x3d0] sm:$0xff]
    %v179 = vld [vmem:[#allocation3 + $0x3d8] sm:$0xff]
    %v180 = vld [vmem:[#allocation3 + $0x3e0] sm:$0xff]
    %v181 = vld [vmem:[#allocation3 + $0x3e8] sm:$0xff]
    %v182 = vld [vmem:[#allocation3 + $0x3f0] sm:$0xff]
    %v183 = vld [vmem:[#allocation3 + $0x3f8] sm:$0xff]
    %v184 = vld [vmem:[#allocation3 + $0x400] sm:$0xff]
    %v185 = vld [vmem:[#allocation3 + $0x408] sm:$0xff]
    %v186 = vld [vmem:[#allocation3 + $0x410] sm:$0xff]
    %v187 = vld [vmem:[#allocation3 + $0x418] sm:$0xff]
    %v188 = vld [vmem:[#allocation3 + $0x420] sm:$0xff]
    %v189 = vld [vmem:[#allocation3 + $0x428] sm:$0xff]
    %v190 = vld [vmem:[#allocation3 + $0x430] sm:$0xff]
    %v191 = vld [vmem:[#allocation3 + $0x438] sm:$0xff]
    %v192 = vld [vmem:[#allocation3 + $0x440] sm:$0xff]
    %v193 = vld [vmem:[#allocation3 + $0x448] sm:$0xff]
    %v194 = vld [vmem:[#allocation3 + $0x450] sm:$0xff]
    %v195 = vld [vmem:[#allocation3 + $0x458] sm:$0xff]
    %v196 = vld [vmem:[#allocation3 + $0x460] sm:$0xff]
    %v197 = vld [vmem:[#allocation3 + $0x468] sm:$0xff]
    %v198 = vld [vmem:[#allocation3 + $0x470] sm:$0xff]
    %v199 = vld [vmem:[#allocation3 + $0x478] sm:$0xff]
    %v200 = vld [vmem:[#allocation3 + $0x480] sm:$0xff]
    %v201 = vld [vmem:[#allocation3 + $0x488] sm:$0xff]
    %v202 = vld [vmem:[#allocation3 + $0x490] sm:$0xff]
    %v203 = vld [vmem:[#allocation3 + $0x498] sm:$0xff]
    %v204 = vld [vmem:[#allocation3 + $0x4a0] sm:$0xff]
    %v205 = vld [vmem:[#allocation3 + $0x4a8] sm:$0xff]
    %v206 = vld [vmem:[#allocation3 + $0x4b0] sm:$0xff]
    %v207 = vld [vmem:[#allocation3 + $0x4b8] sm:$0xff]
    %v208 = vld [vmem:[#allocation3 + $0x4c0] sm:$0xff]
    %v209 = vld [vmem:[#allocation3 + $0x4c8] sm:$0xff]
    %v210 = vld [vmem:[#allocation3 + $0x4d0] sm:$0xff]
    %v211 = vld [vmem:[#allocation3 + $0x4d8] sm:$0xff]
    %v212 = vld [vmem:[#allocation3 + $0x4e0] sm:$0xff]
    %v213 = vld [vmem:[#allocation3 + $0x4e8] sm:$0xff]
    %v214 = vld [vmem:[#allocation3 + $0x4f0] sm:$0xff]
    %v215 = vld [vmem:[#allocation3 + $0x4f8] sm:$0xff]
    %v216 = vld [vmem:[#allocation3 + $0x500] sm:$0xff]
    %v217 = vld [vmem:[#allocation3 + $0x508] sm:$0xff]
    %v218 = vld [vmem:[#allocation3 + $0x510] sm:$0xff]
    %v219 = vld [vmem:[#allocation3 + $0x518] sm:$0xff]
    %v220 = vld [vmem:[#allocation3 + $0x520] sm:$0xff]
    %v221 = vld [vmem:[#allocation3 + $0x528] sm:$0xff]
    %v222 = vld [vmem:[#allocation3 + $0x530] sm:$0xff]
    %v223 = vld [vmem:[#allocation3 + $0x538] sm:$0xff]
    %v224 = vld [vmem:[#allocation3 + $0x540] sm:$0xff]
    %v225 = vld [vmem:[#allocation3 + $0x548] sm:$0xff]
    %v226 = vld [vmem:[#allocation3 + $0x550] sm:$0xff]
    %v227 = vld [vmem:[#allocation3 + $0x558] sm:$0xff]
    %v228 = vld [vmem:[#allocation3 + $0x560] sm:$0xff]
    %v229 = vld [vmem:[#allocation3 + $0x568] sm:$0xff]
    %v230 = vld [vmem:[#allocation3 + $0x570] sm:$0xff]
    %v231 = vld [vmem:[#allocation3 + $0x578] sm:$0xff]
    %v232 = vld [vmem:[#allocation3 + $0x580] sm:$0xff]
    %v233 = vld [vmem:[#allocation3 + $0x588] sm:$0xff]
    %v234 = vld [vmem:[#allocation3 + $0x590] sm:$0xff]
    %v235 = vld [vmem:[#allocation3 + $0x598] sm:$0xff]
    %v236 = vld [vmem:[#allocation3 + $0x5a0] sm:$0xff]
    %v237 = vld [vmem:[#allocation3 + $0x5a8] sm:$0xff]
    %v238 = vld [vmem:[#allocation3 + $0x5b0] sm:$0xff]
    %v239 = vld [vmem:[#allocation3 + $0x5b8] sm:$0xff]
    %v240 = vld [vmem:[#allocation3 + $0x5c0] sm:$0xff]
    %v241 = vld [vmem:[#allocation3 + $0x5c8] sm:$0xff]
    %v242 = vld [vmem:[#allocation3 + $0x5d0] sm:$0xff]
    %v243 = vld [vmem:[#allocation3 + $0x5d8] sm:$0xff]
    %v244 = vld [vmem:[#allocation3 + $0x5e0] sm:$0xff]
    %v245 = vld [vmem:[#allocation3 + $0x5e8] sm:$0xff]
    %v246 = vld [vmem:[#allocation3 + $0x5f0] sm:$0xff]
    %v247 = vld [vmem:[#allocation3 + $0x5f8] sm:$0xff]
    %v248 = vld [vmem:[#allocation3 + $0x600] sm:$0xff]
    %v249 = vld [vmem:[#allocation3 + $0x608] sm:$0xff]
    %v250 = vld [vmem:[#allocation3 + $0x610] sm:$0xff]
    %v251 = vld [vmem:[#allocation3 + $0x618] sm:$0xff]
    %v252 = vld [vmem:[#allocation3 + $0x620] sm:$0xff]
    %v253 = vld [vmem:[#allocation3 + $0x628] sm:$0xff]
    %v254 = vld [vmem:[#allocation3 + $0x630] sm:$0xff]
    %v255 = vld [vmem:[#allocation3 + $0x638] sm:$0xff]
    %v256 = vld [vmem:[#allocation3 + $0x640] sm:$0xff]
    %v257 = vld [vmem:[#allocation3 + $0x648] sm:$0xff]
    %v258 = vld [vmem:[#allocation3 + $0x650] sm:$0xff]
    %v259 = vld [vmem:[#allocation3 + $0x658] sm:$0xff]
    %v260 = vld [vmem:[#allocation3 + $0x660] sm:$0xff]
    %v261 = vld [vmem:[#allocation3 + $0x668] sm:$0xff]
    %v262 = vld [vmem:[#allocation3 + $0x670] sm:$0xff]
    %v263 = vld [vmem:[#allocation3 + $0x678] sm:$0xff]
    %v264 = vld [vmem:[#allocation3 + $0x680] sm:$0xff]
    %v265 = vld [vmem:[#allocation3 + $0x688] sm:$0xff]
    %v266 = vld [vmem:[#allocation3 + $0x690] sm:$0xff]
    %v267 = vld [vmem:[#allocation3 + $0x698] sm:$0xff]
    %v268 = vld [vmem:[#allocation3 + $0x6a0] sm:$0xff]
    %v269 = vld [vmem:[#allocation3 + $0x6a8] sm:$0xff]
    %v270 = vld [vmem:[#allocation3 + $0x6b0] sm:$0xff]
    %v271 = vld [vmem:[#allocation3 + $0x6b8] sm:$0xff]
    %v272 = vld [vmem:[#allocation3 + $0x6c0] sm:$0xff]
    %v273 = vld [vmem:[#allocation3 + $0x6c8] sm:$0xff]
    %v274 = vld [vmem:[#allocation3 + $0x6d0] sm:$0xff]
    %v275 = vld [vmem:[#allocation3 + $0x6d8] sm:$0xff]
    %v276 = vld [vmem:[#allocation3 + $0x6e0] sm:$0xff]
    %v277 = vld [vmem:[#allocation3 + $0x6e8] sm:$0xff]
    %v278 = vld [vmem:[#allocation3 + $0x6f0] sm:$0xff]
    %v279 = vld [vmem:[#allocation3 + $0x6f8] sm:$0xff]
    %v280 = vld [vmem:[#allocation3 + $0x700] sm:$0xff]
    %v281 = vld [vmem:[#allocation3 + $0x708] sm:$0xff]
    %v282 = vld [vmem:[#allocation3 + $0x710] sm:$0xff]
    %v283 = vld [vmem:[#allocation3 + $0x718] sm:$0xff]
    %v284 = vld [vmem:[#allocation3 + $0x720] sm:$0xff]
    %v285 = vld [vmem:[#allocation3 + $0x728] sm:$0xff]
    %v286 = vld [vmem:[#allocation3 + $0x730] sm:$0xff]
    %v287 = vld [vmem:[#allocation3 + $0x738] sm:$0xff]
    %v288 = vld [vmem:[#allocation3 + $0x740] sm:$0xff]
    %v289 = vld [vmem:[#allocation3 + $0x748] sm:$0xff]
    %v290 = vld [vmem:[#allocation3 + $0x750] sm:$0xff]
    %v291 = vld [vmem:[#allocation3 + $0x758] sm:$0xff]
    %v292 = vld [vmem:[#allocation3 + $0x760] sm:$0xff]
    %v293 = vld [vmem:[#allocation3 + $0x768] sm:$0xff]
    %v294 = vld [vmem:[#allocation3 + $0x770] sm:$0xff]
    %v295 = vld [vmem:[#allocation3 + $0x778] sm:$0xff]
    %v298 = vunpack.c.l.b16 %v54
    %v299 = vunpack.c.h.b16 %v54
    %v300 = vunpack.c.l.b16 %v55
    %v301 = vpack.c.b16 %v298, %v298
    %v302 = vpack.c.b16 %v299, %v299
    %v303 = vpack.c.b16 %v300, %v300
    %v547 = vunpack.c.l.b16 %v56
    %v548 = vunpack.c.h.b16 %v56
    %v549 = vunpack.c.l.b16 %v57
    %v550 = vunpack.c.h.b16 %v57
    %v551 = vunpack.c.l.b16 %v58
    %v552 = vunpack.c.h.b16 %v58
    %v553 = vunpack.c.l.b16 %v59
    %v554 = vunpack.c.h.b16 %v59
    %v555 = vunpack.c.l.b16 %v60
    %v556 = vunpack.c.h.b16 %v60
    %v557 = vunpack.c.l.b16 %v61
    %v558 = vunpack.c.h.b16 %v61
    %v559 = vunpack.c.l.b16 %v62
    %v560 = vunpack.c.h.b16 %v62
    %v561 = vunpack.c.l.b16 %v63
    %v562 = vunpack.c.h.b16 %v63
    %v563 = vunpack.c.l.b16 %v64
    %v564 = vunpack.c.h.b16 %v64
    %v565 = vunpack.c.l.b16 %v65
    %v566 = vunpack.c.h.b16 %v65
    %v567 = vunpack.c.l.b16 %v66
    %v568 = vunpack.c.h.b16 %v66
    %v569 = vunpack.c.l.b16 %v67
    %v570 = vunpack.c.h.b16 %v67
    %v571 = vunpack.c.l.b16 %v68
    %v572 = vunpack.c.h.b16 %v68
    %v573 = vunpack.c.l.b16 %v69
    %v574 = vunpack.c.h.b16 %v69
    %v575 = vunpack.c.l.b16 %v70
    %v576 = vunpack.c.h.b16 %v70
    %v577 = vunpack.c.l.b16 %v71
    %v578 = vunpack.c.h.b16 %v71
    %v579 = vunpack.c.l.b16 %v72
    %v580 = vunpack.c.h.b16 %v72
    %v581 = vunpack.c.l.b16 %v73
    %v582 = vunpack.c.h.b16 %v73
    %v583 = vunpack.c.l.b16 %v74
    %v584 = vunpack.c.h.b16 %v74
    %v585 = vunpack.c.l.b16 %v75
    %v586 = vunpack.c.h.b16 %v75
    %v587 = vunpack.c.l.b16 %v76
    %v588 = vunpack.c.h.b16 %v76
    %v589 = vunpack.c.l.b16 %v77
    %v590 = vunpack.c.h.b16 %v77
    %v591 = vunpack.c.l.b16 %v78
    %v592 = vunpack.c.h.b16 %v78
    %v593 = vunpack.c.l.b16 %v79
    %v594 = vunpack.c.h.b16 %v79
    %v595 = vunpack.c.l.b16 %v80
    %v596 = vunpack.c.h.b16 %v80
    %v597 = vunpack.c.l.b16 %v81
    %v598 = vunpack.c.h.b16 %v81
    %v599 = vunpack.c.l.b16 %v82
    %v600 = vunpack.c.h.b16 %v82
    %v601 = vunpack.c.l.b16 %v83
    %v602 = vunpack.c.h.b16 %v83
    %v603 = vunpack.c.l.b16 %v84
    %v604 = vunpack.c.h.b16 %v84
    %v605 = vunpack.c.l.b16 %v85
    %v606 = vunpack.c.h.b16 %v85
    %v607 = vunpack.c.l.b16 %v86
    %v608 = vunpack.c.h.b16 %v86
    %v609 = vunpack.c.l.b16 %v87
    %v610 = vunpack.c.h.b16 %v87
    %v611 = vunpack.c.l.b16 %v88
    %v612 = vunpack.c.h.b16 %v88
    %v613 = vunpack.c.l.b16 %v89
    %v614 = vunpack.c.h.b16 %v89
    %v615 = vunpack.c.l.b16 %v90
    %v616 = vunpack.c.h.b16 %v90
    %v617 = vunpack.c.l.b16 %v91
    %v618 = vunpack.c.h.b16 %v91
    %v619 = vunpack.c.l.b16 %v92
    %v620 = vunpack.c.h.b16 %v92
    %v621 = vunpack.c.l.b16 %v93
    %v622 = vunpack.c.h.b16 %v93
    %v623 = vunpack.c.l.b16 %v94
    %v624 = vunpack.c.h.b16 %v94
    %v625 = vunpack.c.l.b16 %v95
    %v626 = vunpack.c.h.b16 %v95
    %v627 = vunpack.c.l.b16 %v96
    %v628 = vunpack.c.h.b16 %v96
    %v629 = vunpack.c.l.b16 %v97
    %v630 = vunpack.c.h.b16 %v97
    %v631 = vunpack.c.l.b16 %v98
    %v632 = vunpack.c.h.b16 %v98
    %v633 = vunpack.c.l.b16 %v99
    %v634 = vunpack.c.h.b16 %v99
    %v635 = vunpack.c.l.b16 %v100
    %v636 = vunpack.c.h.b16 %v100
    %v637 = vunpack.c.l.b16 %v101
    %v638 = vunpack.c.h.b16 %v101
    %v639 = vunpack.c.l.b16 %v102
    %v640 = vunpack.c.h.b16 %v102
    %v641 = vunpack.c.l.b16 %v103
    %v642 = vunpack.c.h.b16 %v103
    %v643 = vunpack.c.l.b16 %v104
    %v644 = vunpack.c.h.b16 %v104
    %v645 = vunpack.c.l.b16 %v105
    %v646 = vunpack.c.h.b16 %v105
    %v647 = vunpack.c.l.b16 %v106
    %v648 = vunpack.c.h.b16 %v106
    %v649 = vunpack.c.l.b16 %v107
    %v650 = vunpack.c.h.b16 %v107
    %v651 = vunpack.c.l.b16 %v108
    %v652 = vunpack.c.h.b16 %v108
    %v653 = vunpack.c.l.b16 %v109
    %v654 = vunpack.c.h.b16 %v109
    %v655 = vunpack.c.l.b16 %v110
    %v656 = vunpack.c.h.b16 %v110
    %v657 = vunpack.c.l.b16 %v111
    %v658 = vunpack.c.h.b16 %v111
    %v659 = vunpack.c.l.b16 %v112
    %v660 = vunpack.c.h.b16 %v112
    %v661 = vunpack.c.l.b16 %v113
    %v662 = vunpack.c.h.b16 %v113
    %v663 = vunpack.c.l.b16 %v114
    %v664 = vunpack.c.h.b16 %v114
    %v665 = vunpack.c.l.b16 %v115
    %v666 = vunpack.c.h.b16 %v115
    %v667 = vunpack.c.l.b16 %v116
    %v668 = vunpack.c.h.b16 %v116
    %v669 = vunpack.c.l.b16 %v117
    %v670 = vunpack.c.h.b16 %v117
    %v671 = vunpack.c.l.b16 %v118
    %v672 = vunpack.c.h.b16 %v118
    %v673 = vunpack.c.l.b16 %v119
    %v674 = vunpack.c.h.b16 %v119
    %v675 = vunpack.c.l.b16 %v120
    %v676 = vunpack.c.h.b16 %v120
    %v677 = vunpack.c.l.b16 %v121
    %v678 = vunpack.c.h.b16 %v121
    %v679 = vunpack.c.l.b16 %v122
    %v680 = vunpack.c.h.b16 %v122
    %v681 = vunpack.c.l.b16 %v123
    %v682 = vunpack.c.h.b16 %v123
    %v683 = vunpack.c.l.b16 %v124
    %v684 = vunpack.c.h.b16 %v124
    %v685 = vunpack.c.l.b16 %v125
    %v686 = vunpack.c.h.b16 %v125
    %v687 = vunpack.c.l.b16 %v126
    %v688 = vunpack.c.h.b16 %v126
    %v689 = vunpack.c.l.b16 %v127
    %v690 = vunpack.c.h.b16 %v127
    %v691 = vunpack.c.l.b16 %v128
    %v692 = vunpack.c.h.b16 %v128
    %v693 = vunpack.c.l.b16 %v129
    %v694 = vunpack.c.h.b16 %v129
    %v695 = vunpack.c.l.b16 %v130
    %v696 = vunpack.c.h.b16 %v130
    %v697 = vunpack.c.l.b16 %v131
    %v698 = vunpack.c.h.b16 %v131
    %v699 = vunpack.c.l.b16 %v132
    %v700 = vunpack.c.h.b16 %v132
    %v701 = vunpack.c.l.b16 %v133
    %v702 = vunpack.c.h.b16 %v133
    %v703 = vunpack.c.l.b16 %v134
    %v704 = vunpack.c.h.b16 %v134
    %v705 = vunpack.c.l.b16 %v135
    %v706 = vunpack.c.h.b16 %v135
    %v707 = vunpack.c.l.b16 %v136
    %v708 = vunpack.c.h.b16 %v136
    %v709 = vunpack.c.l.b16 %v137
    %v710 = vunpack.c.h.b16 %v137
    %v711 = vunpack.c.l.b16 %v138
    %v712 = vunpack.c.h.b16 %v138
    %v713 = vunpack.c.l.b16 %v139
    %v714 = vunpack.c.h.b16 %v139
    %v715 = vunpack.c.l.b16 %v140
    %v716 = vunpack.c.h.b16 %v140
    %v717 = vunpack.c.l.b16 %v141
    %v718 = vunpack.c.h.b16 %v141
    %v719 = vunpack.c.l.b16 %v142
    %v720 = vunpack.c.h.b16 %v142
    %v721 = vunpack.c.l.b16 %v143
    %v722 = vunpack.c.h.b16 %v143
    %v723 = vunpack.c.l.b16 %v144
    %v724 = vunpack.c.h.b16 %v144
    %v725 = vunpack.c.l.b16 %v145
    %v726 = vunpack.c.h.b16 %v145
    %v727 = vunpack.c.l.b16 %v146
    %v728 = vunpack.c.h.b16 %v146
    %v729 = vunpack.c.l.b16 %v147
    %v730 = vunpack.c.h.b16 %v147
    %v731 = vunpack.c.l.b16 %v148
    %v732 = vunpack.c.h.b16 %v148
    %v733 = vunpack.c.l.b16 %v149
    %v734 = vunpack.c.h.b16 %v149
    %v735 = vunpack.c.l.b16 %v150
    %v736 = vunpack.c.h.b16 %v150
    %v737 = vunpack.c.l.b16 %v151
    %v738 = vunpack.c.h.b16 %v151
    %v739 = vunpack.c.l.b16 %v152
    %v740 = vunpack.c.h.b16 %v152
    %v741 = vunpack.c.l.b16 %v153
    %v742 = vunpack.c.h.b16 %v153
    %v743 = vunpack.c.l.b16 %v154
    %v744 = vunpack.c.h.b16 %v154
    %v745 = vunpack.c.l.b16 %v155
    %v746 = vunpack.c.h.b16 %v155
    %v747 = vunpack.c.l.b16 %v156
    %v748 = vunpack.c.h.b16 %v156
    %v749 = vunpack.c.l.b16 %v157
    %v750 = vunpack.c.h.b16 %v157
    %v751 = vunpack.c.l.b16 %v158
    %v752 = vunpack.c.h.b16 %v158
    %v753 = vunpack.c.l.b16 %v159
    %v754 = vunpack.c.h.b16 %v159
    %v755 = vunpack.c.l.b16 %v160
    %v756 = vunpack.c.h.b16 %v160
    %v757 = vunpack.c.l.b16 %v161
    %v758 = vunpack.c.h.b16 %v161
    %v759 = vunpack.c.l.b16 %v162
    %v760 = vunpack.c.h.b16 %v162
    %v761 = vunpack.c.l.b16 %v163
    %v762 = vunpack.c.h.b16 %v163
    %v763 = vunpack.c.l.b16 %v164
    %v764 = vunpack.c.h.b16 %v164
    %v765 = vunpack.c.l.b16 %v165
    %v766 = vunpack.c.h.b16 %v165
    %v767 = vunpack.c.l.b16 %v166
    %v768 = vunpack.c.h.b16 %v166
    %v769 = vunpack.c.l.b16 %v167
    %v770 = vunpack.c.h.b16 %v167
    %v771 = vunpack.c.l.b16 %v168
    %v772 = vunpack.c.h.b16 %v168
    %v773 = vunpack.c.l.b16 %v169
    %v774 = vunpack.c.h.b16 %v169
    %v775 = vunpack.c.l.b16 %v170
    %v776 = vunpack.c.h.b16 %v170
    %v777 = vunpack.c.l.b16 %v171
    %v778 = vunpack.c.h.b16 %v171
    %v779 = vunpack.c.l.b16 %v172
    %v780 = vunpack.c.h.b16 %v172
    %v781 = vunpack.c.l.b16 %v173
    %v782 = vunpack.c.h.b16 %v173
    %v783 = vunpack.c.l.b16 %v174
    %v784 = vunpack.c.h.b16 %v174
    %v785 = vunpack.c.l.b16 %v175
    %v786 = vunpack.c.h.b16 %v175
    %v787 = vunpack.c.l.b16 %v176
    %v788 = vunpack.c.h.b16 %v176
    %v789 = vunpack.c.l.b16 %v177
    %v790 = vunpack.c.h.b16 %v177
    %v791 = vunpack.c.l.b16 %v178
    %v792 = vunpack.c.h.b16 %v178
    %v793 = vunpack.c.l.b16 %v179
    %v794 = vunpack.c.h.b16 %v179
    %v795 = vunpack.c.l.b16 %v180
    %v796 = vunpack.c.h.b16 %v180
    %v797 = vunpack.c.l.b16 %v181
    %v798 = vunpack.c.h.b16 %v181
    %v799 = vunpack.c.l.b16 %v182
    %v800 = vunpack.c.h.b16 %v182
    %v801 = vunpack.c.l.b16 %v183
    %v802 = vunpack.c.h.b16 %v183
    %v803 = vunpack.c.l.b16 %v184
    %v804 = vunpack.c.h.b16 %v184
    %v805 = vunpack.c.l.b16 %v185
    %v806 = vunpack.c.h.b16 %v185
    %v807 = vunpack.c.l.b16 %v186
    %v808 = vunpack.c.h.b16 %v186
    %v809 = vunpack.c.l.b16 %v187
    %v810 = vunpack.c.h.b16 %v187
    %v811 = vunpack.c.l.b16 %v188
    %v812 = vunpack.c.h.b16 %v188
    %v813 = vunpack.c.l.b16 %v189
    %v814 = vunpack.c.h.b16 %v189
    %v815 = vunpack.c.l.b16 %v190
    %v816 = vunpack.c.h.b16 %v190
    %v817 = vunpack.c.l.b16 %v191
    %v818 = vunpack.c.h.b16 %v191
    %v819 = vunpack.c.l.b16 %v192
    %v820 = vunpack.c.h.b16 %v192
    %v821 = vunpack.c.l.b16 %v193
    %v822 = vunpack.c.h.b16 %v193
    %v823 = vunpack.c.l.b16 %v194
    %v824 = vunpack.c.h.b16 %v194
    %v825 = vunpack.c.l.b16 %v195
    %v826 = vunpack.c.h.b16 %v195
    %v827 = vunpack.c.l.b16 %v196
    %v828 = vunpack.c.h.b16 %v196
    %v829 = vunpack.c.l.b16 %v197
    %v830 = vunpack.c.h.b16 %v197
    %v831 = vunpack.c.l.b16 %v198
    %v832 = vunpack.c.h.b16 %v198
    %v833 = vunpack.c.l.b16 %v199
    %v834 = vunpack.c.h.b16 %v199
    %v835 = vunpack.c.l.b16 %v200
    %v836 = vunpack.c.h.b16 %v200
    %v837 = vunpack.c.l.b16 %v201
    %v838 = vunpack.c.h.b16 %v201
    %v839 = vunpack.c.l.b16 %v202
    %v840 = vunpack.c.h.b16 %v202
    %v841 = vunpack.c.l.b16 %v203
    %v842 = vunpack.c.h.b16 %v203
    %v843 = vunpack.c.l.b16 %v204
    %v844 = vunpack.c.h.b16 %v204
    %v845 = vunpack.c.l.b16 %v205
    %v846 = vunpack.c.h.b16 %v205
    %v847 = vunpack.c.l.b16 %v206
    %v848 = vunpack.c.h.b16 %v206
    %v849 = vunpack.c.l.b16 %v207
    %v850 = vunpack.c.h.b16 %v207
    %v851 = vunpack.c.l.b16 %v208
    %v852 = vunpack.c.h.b16 %v208
    %v853 = vunpack.c.l.b16 %v209
    %v854 = vunpack.c.h.b16 %v209
    %v855 = vunpack.c.l.b16 %v210
    %v856 = vunpack.c.h.b16 %v210
    %v857 = vunpack.c.l.b16 %v211
    %v858 = vunpack.c.h.b16 %v211
    %v859 = vunpack.c.l.b16 %v212
    %v860 = vunpack.c.h.b16 %v212
    %v861 = vunpack.c.l.b16 %v213
    %v862 = vunpack.c.h.b16 %v213
    %v863 = vunpack.c.l.b16 %v214
    %v864 = vunpack.c.h.b16 %v214
    %v865 = vunpack.c.l.b16 %v215
    %v866 = vunpack.c.h.b16 %v215
    %v867 = vunpack.c.l.b16 %v216
    %v868 = vunpack.c.h.b16 %v216
    %v869 = vunpack.c.l.b16 %v217
    %v870 = vunpack.c.h.b16 %v217
    %v871 = vunpack.c.l.b16 %v218
    %v872 = vunpack.c.h.b16 %v218
    %v873 = vunpack.c.l.b16 %v219
    %v874 = vunpack.c.h.b16 %v219
    %v875 = vunpack.c.l.b16 %v220
    %v876 = vunpack.c.h.b16 %v220
    %v877 = vunpack.c.l.b16 %v221
    %v878 = vunpack.c.h.b16 %v221
    %v879 = vunpack.c.l.b16 %v222
    %v880 = vunpack.c.h.b16 %v222
    %v881 = vunpack.c.l.b16 %v223
    %v882 = vunpack.c.h.b16 %v223
    %v883 = vunpack.c.l.b16 %v224
    %v884 = vunpack.c.h.b16 %v224
    %v885 = vunpack.c.l.b16 %v225
    %v886 = vunpack.c.h.b16 %v225
    %v887 = vunpack.c.l.b16 %v226
    %v888 = vunpack.c.h.b16 %v226
    %v889 = vunpack.c.l.b16 %v227
    %v890 = vunpack.c.h.b16 %v227
    %v891 = vunpack.c.l.b16 %v228
    %v892 = vunpack.c.h.b16 %v228
    %v893 = vunpack.c.l.b16 %v229
    %v894 = vunpack.c.h.b16 %v229
    %v895 = vunpack.c.l.b16 %v230
    %v896 = vunpack.c.h.b16 %v230
    %v897 = vunpack.c.l.b16 %v231
    %v898 = vunpack.c.h.b16 %v231
    %v899 = vunpack.c.l.b16 %v232
    %v900 = vunpack.c.h.b16 %v232
    %v901 = vunpack.c.l.b16 %v233
    %v902 = vunpack.c.h.b16 %v233
    %v903 = vunpack.c.l.b16 %v234
    %v904 = vunpack.c.h.b16 %v234
    %v905 = vunpack.c.l.b16 %v235
    %v906 = vunpack.c.h.b16 %v235
    %v907 = vunpack.c.l.b16 %v236
    %v908 = vunpack.c.h.b16 %v236
    %v909 = vunpack.c.l.b16 %v237
    %v910 = vunpack.c.h.b16 %v237
    %v911 = vunpack.c.l.b16 %v238
    %v912 = vunpack.c.h.b16 %v238
    %v913 = vunpack.c.l.b16 %v239
    %v914 = vunpack.c.h.b16 %v239
    %v915 = vunpack.c.l.b16 %v240
    %v916 = vunpack.c.h.b16 %v240
    %v917 = vunpack.c.l.b16 %v241
    %v918 = vunpack.c.h.b16 %v241
    %v919 = vunpack.c.l.b16 %v242
    %v920 = vunpack.c.h.b16 %v242
    %v921 = vunpack.c.l.b16 %v243
    %v922 = vunpack.c.h.b16 %v243
    %v923 = vunpack.c.l.b16 %v244
    %v924 = vunpack.c.h.b16 %v244
    %v925 = vunpack.c.l.b16 %v245
    %v926 = vunpack.c.h.b16 %v245
    %v927 = vunpack.c.l.b16 %v246
    %v928 = vunpack.c.h.b16 %v246
    %v929 = vunpack.c.l.b16 %v247
    %v930 = vunpack.c.h.b16 %v247
    %v931 = vunpack.c.l.b16 %v248
    %v932 = vunpack.c.h.b16 %v248
    %v933 = vunpack.c.l.b16 %v249
    %v934 = vunpack.c.h.b16 %v249
    %v935 = vunpack.c.l.b16 %v250
    %v936 = vunpack.c.h.b16 %v250
    %v937 = vunpack.c.l.b16 %v251
    %v938 = vunpack.c.h.b16 %v251
    %v939 = vunpack.c.l.b16 %v252
    %v940 = vunpack.c.h.b16 %v252
    %v941 = vunpack.c.l.b16 %v253
    %v942 = vunpack.c.h.b16 %v253
    %v943 = vunpack.c.l.b16 %v254
    %v944 = vunpack.c.h.b16 %v254
    %v945 = vunpack.c.l.b16 %v255
    %v946 = vunpack.c.h.b16 %v255
    %v947 = vunpack.c.l.b16 %v256
    %v948 = vunpack.c.h.b16 %v256
    %v949 = vunpack.c.l.b16 %v257
    %v950 = vunpack.c.h.b16 %v257
    %v951 = vunpack.c.l.b16 %v258
    %v952 = vunpack.c.h.b16 %v258
    %v953 = vunpack.c.l.b16 %v259
    %v954 = vunpack.c.h.b16 %v259
    %v955 = vunpack.c.l.b16 %v260
    %v956 = vunpack.c.h.b16 %v260
    %v957 = vunpack.c.l.b16 %v261
    %v958 = vunpack.c.h.b16 %v261
    %v959 = vunpack.c.l.b16 %v262
    %v960 = vunpack.c.h.b16 %v262
    %v961 = vunpack.c.l.b16 %v263
    %v962 = vunpack.c.h.b16 %v263
    %v963 = vunpack.c.l.b16 %v264
    %v964 = vunpack.c.h.b16 %v264
    %v965 = vunpack.c.l.b16 %v265
    %v966 = vunpack.c.h.b16 %v265
    %v967 = vunpack.c.l.b16 %v266
    %v968 = vunpack.c.h.b16 %v266
    %v969 = vunpack.c.l.b16 %v267
    %v970 = vunpack.c.h.b16 %v267
    %v971 = vunpack.c.l.b16 %v268
    %v972 = vunpack.c.h.b16 %v268
    %v973 = vunpack.c.l.b16 %v269
    %v974 = vunpack.c.h.b16 %v269
    %v975 = vunpack.c.l.b16 %v270
    %v976 = vunpack.c.h.b16 %v270
    %v977 = vunpack.c.l.b16 %v271
    %v978 = vunpack.c.h.b16 %v271
    %v979 = vunpack.c.l.b16 %v272
    %v980 = vunpack.c.h.b16 %v272
    %v981 = vunpack.c.l.b16 %v273
    %v982 = vunpack.c.h.b16 %v273
    %v983 = vunpack.c.l.b16 %v274
    %v984 = vunpack.c.h.b16 %v274
    %v985 = vunpack.c.l.b16 %v275
    %v986 = vunpack.c.h.b16 %v275
    %v987 = vunpack.c.l.b16 %v276
    %v988 = vunpack.c.h.b16 %v276
    %v989 = vunpack.c.l.b16 %v277
    %v990 = vunpack.c.h.b16 %v277
    %v991 = vunpack.c.l.b16 %v278
    %v992 = vunpack.c.h.b16 %v278
    %v993 = vunpack.c.l.b16 %v279
    %v994 = vunpack.c.h.b16 %v279
    %v995 = vunpack.c.l.b16 %v280
    %v996 = vunpack.c.h.b16 %v280
    %v997 = vunpack.c.l.b16 %v281
    %v998 = vunpack.c.h.b16 %v281
    %v999 = vunpack.c.l.b16 %v282
    %v1000 = vunpack.c.h.b16 %v282
    %v1001 = vunpack.c.l.b16 %v283
    %v1002 = vunpack.c.h.b16 %v283
    %v1003 = vunpack.c.l.b16 %v284
    %v1004 = vunpack.c.h.b16 %v284
    %v1005 = vunpack.c.l.b16 %v285
    %v1006 = vunpack.c.h.b16 %v285
    %v1007 = vunpack.c.l.b16 %v286
    %v1008 = vunpack.c.h.b16 %v286
    %v1009 = vunpack.c.l.b16 %v287
    %v1010 = vunpack.c.h.b16 %v287
    %v1011 = vunpack.c.l.b16 %v288
    %v1012 = vunpack.c.h.b16 %v288
    %v1013 = vunpack.c.l.b16 %v289
    %v1014 = vunpack.c.h.b16 %v289
    %v1015 = vunpack.c.l.b16 %v290
    %v1016 = vunpack.c.h.b16 %v290
    %v1017 = vunpack.c.l.b16 %v291
    %v1018 = vunpack.c.h.b16 %v291
    %v1019 = vunpack.c.l.b16 %v292
    %v1020 = vunpack.c.h.b16 %v292
    %v1021 = vunpack.c.l.b16 %v293
    %v1022 = vunpack.c.h.b16 %v293
    %v1023 = vunpack.c.l.b16 %v294
    %v1024 = vunpack.c.h.b16 %v294
    %v1025 = vunpack.c.l.b16 %v295
    %v1026 = vunpack.c.h.b16 %v295
    %v1027 = vpack.c.b16 %v557, %v547
    %v1028 = vpack.c.b16 %v558, %v548
    %v1029 = vpack.c.b16 %v559, %v549
    %v1030 = vpack.c.b16 %v560, %v550
    %v1031 = vpack.c.b16 %v561, %v551
    %v1032 = vpack.c.b16 %v562, %v552
    %v1033 = vpack.c.b16 %v563, %v553
    %v1034 = vpack.c.b16 %v564, %v554
    %v1035 = vpack.c.b16 %v565, %v555
    %v1036 = vpack.c.b16 %v566, %v556
    %v1037 = vpack.c.b16 %v577, %v567
    %v1038 = vpack.c.b16 %v578, %v568
    %v1039 = vpack.c.b16 %v579, %v569
    %v1040 = vpack.c.b16 %v580, %v570
    %v1041 = vpack.c.b16 %v581, %v571
    %v1042 = vpack.c.b16 %v582, %v572
    %v1043 = vpack.c.b16 %v583, %v573
    %v1044 = vpack.c.b16 %v584, %v574
    %v1045 = vpack.c.b16 %v585, %v575
    %v1046 = vpack.c.b16 %v586, %v576
    %v1047 = vpack.c.b16 %v597, %v587
    %v1048 = vpack.c.b16 %v598, %v588
    %v1049 = vpack.c.b16 %v599, %v589
    %v1050 = vpack.c.b16 %v600, %v590
    %v1051 = vpack.c.b16 %v601, %v591
    %v1052 = vpack.c.b16 %v602, %v592
    %v1053 = vpack.c.b16 %v603, %v593
    %v1054 = vpack.c.b16 %v604, %v594
    %v1055 = vpack.c.b16 %v605, %v595
    %v1056 = vpack.c.b16 %v606, %v596
    %v1057 = vpack.c.b16 %v617, %v607
    %v1058 = vpack.c.b16 %v618, %v608
    %v1059 = vpack.c.b16 %v619, %v609
    %v1060 = vpack.c.b16 %v620, %v610
    %v1061 = vpack.c.b16 %v621, %v611
    %v1062 = vpack.c.b16 %v622, %v612
    %v1063 = vpack.c.b16 %v623, %v613
    %v1064 = vpack.c.b16 %v624, %v614
    %v1065 = vpack.c.b16 %v625, %v615
    %v1066 = vpack.c.b16 %v626, %v616
    %v1067 = vpack.c.b16 %v637, %v627
    %v1068 = vpack.c.b16 %v638, %v628
    %v1069 = vpack.c.b16 %v639, %v629
    %v1070 = vpack.c.b16 %v640, %v630
    %v1071 = vpack.c.b16 %v641, %v631
    %v1072 = vpack.c.b16 %v642, %v632
    %v1073 = vpack.c.b16 %v643, %v633
    %v1074 = vpack.c.b16 %v644, %v634
    %v1075 = vpack.c.b16 %v645, %v635
    %v1076 = vpack.c.b16 %v646, %v636
    %v1077 = vpack.c.b16 %v657, %v647
    %v1078 = vpack.c.b16 %v658, %v648
    %v1079 = vpack.c.b16 %v659, %v649
    %v1080 = vpack.c.b16 %v660, %v650
    %v1081 = vpack.c.b16 %v661, %v651
    %v1082 = vpack.c.b16 %v662, %v652
    %v1083 = vpack.c.b16 %v663, %v653
    %v1084 = vpack.c.b16 %v664, %v654
    %v1085 = vpack.c.b16 %v665, %v655
    %v1086 = vpack.c.b16 %v666, %v656
    %v1087 = vpack.c.b16 %v677, %v667
    %v1088 = vpack.c.b16 %v678, %v668
    %v1089 = vpack.c.b16 %v679, %v669
    %v1090 = vpack.c.b16 %v680, %v670
    %v1091 = vpack.c.b16 %v681, %v671
    %v1092 = vpack.c.b16 %v682, %v672
    %v1093 = vpack.c.b16 %v683, %v673
    %v1094 = vpack.c.b16 %v684, %v674
    %v1095 = vpack.c.b16 %v685, %v675
    %v1096 = vpack.c.b16 %v686, %v676
    %v1097 = vpack.c.b16 %v697, %v687
    %v1098 = vpack.c.b16 %v698, %v688
    %v1099 = vpack.c.b16 %v699, %v689
    %v1100 = vpack.c.b16 %v700, %v690
    %v1101 = vpack.c.b16 %v701, %v691
    %v1102 = vpack.c.b16 %v702, %v692
    %v1103 = vpack.c.b16 %v703, %v693
    %v1104 = vpack.c.b16 %v704, %v694
    %v1105 = vpack.c.b16 %v705, %v695
    %v1106 = vpack.c.b16 %v706, %v696
    %v1107 = vpack.c.b16 %v717, %v707
    %v1108 = vpack.c.b16 %v718, %v708
    %v1109 = vpack.c.b16 %v719, %v709
    %v1110 = vpack.c.b16 %v720, %v710
    %v1111 = vpack.c.b16 %v721, %v711
    %v1112 = vpack.c.b16 %v722, %v712
    %v1113 = vpack.c.b16 %v723, %v713
    %v1114 = vpack.c.b16 %v724, %v714
    %v1115 = vpack.c.b16 %v725, %v715
    %v1116 = vpack.c.b16 %v726, %v716
    %v1117 = vpack.c.b16 %v737, %v727
    %v1118 = vpack.c.b16 %v738, %v728
    %v1119 = vpack.c.b16 %v739, %v729
    %v1120 = vpack.c.b16 %v740, %v730
    %v1121 = vpack.c.b16 %v741, %v731
    %v1122 = vpack.c.b16 %v742, %v732
    %v1123 = vpack.c.b16 %v743, %v733
    %v1124 = vpack.c.b16 %v744, %v734
    %v1125 = vpack.c.b16 %v745, %v735
    %v1126 = vpack.c.b16 %v746, %v736
    %v1127 = vpack.c.b16 %v757, %v747
    %v1128 = vpack.c.b16 %v758, %v748
    %v1129 = vpack.c.b16 %v759, %v749
    %v1130 = vpack.c.b16 %v760, %v750
    %v1131 = vpack.c.b16 %v761, %v751
    %v1132 = vpack.c.b16 %v762, %v752
    %v1133 = vpack.c.b16 %v763, %v753
    %v1134 = vpack.c.b16 %v764, %v754
    %v1135 = vpack.c.b16 %v765, %v755
    %v1136 = vpack.c.b16 %v766, %v756
    %v1137 = vpack.c.b16 %v777, %v767
    %v1138 = vpack.c.b16 %v778, %v768
    %v1139 = vpack.c.b16 %v779, %v769
    %v1140 = vpack.c.b16 %v780, %v770
    %v1141 = vpack.c.b16 %v781, %v771
    %v1142 = vpack.c.b16 %v782, %v772
    %v1143 = vpack.c.b16 %v783, %v773
    %v1144 = vpack.c.b16 %v784, %v774
    %v1145 = vpack.c.b16 %v785, %v775
    %v1146 = vpack.c.b16 %v786, %v776
    %v1147 = vpack.c.b16 %v797, %v787
    %v1148 = vpack.c.b16 %v798, %v788
    %v1149 = vpack.c.b16 %v799, %v789
    %v1150 = vpack.c.b16 %v800, %v790
    %v1151 = vpack.c.b16 %v801, %v791
    %v1152 = vpack.c.b16 %v802, %v792
    %v1153 = vpack.c.b16 %v803, %v793
    %v1154 = vpack.c.b16 %v804, %v794
    %v1155 = vpack.c.b16 %v805, %v795
    %v1156 = vpack.c.b16 %v806, %v796
    %v1157 = vpack.c.b16 %v817, %v807
    %v1158 = vpack.c.b16 %v818, %v808
    %v1159 = vpack.c.b16 %v819, %v809
    %v1160 = vpack.c.b16 %v820, %v810
    %v1161 = vpack.c.b16 %v821, %v811
    %v1162 = vpack.c.b16 %v822, %v812
    %v1163 = vpack.c.b16 %v823, %v813
    %v1164 = vpack.c.b16 %v824, %v814
    %v1165 = vpack.c.b16 %v825, %v815
    %v1166 = vpack.c.b16 %v826, %v816
    %v1167 = vpack.c.b16 %v837, %v827
    %v1168 = vpack.c.b16 %v838, %v828
    %v1169 = vpack.c.b16 %v839, %v829
    %v1170 = vpack.c.b16 %v840, %v830
    %v1171 = vpack.c.b16 %v841, %v831
    %v1172 = vpack.c.b16 %v842, %v832
    %v1173 = vpack.c.b16 %v843, %v833
    %v1174 = vpack.c.b16 %v844, %v834
    %v1175 = vpack.c.b16 %v845, %v835
    %v1176 = vpack.c.b16 %v846, %v836
    %v1177 = vpack.c.b16 %v857, %v847
    %v1178 = vpack.c.b16 %v858, %v848
    %v1179 = vpack.c.b16 %v859, %v849
    %v1180 = vpack.c.b16 %v860, %v850
    %v1181 = vpack.c.b16 %v861, %v851
    %v1182 = vpack.c.b16 %v862, %v852
    %v1183 = vpack.c.b16 %v863, %v853
    %v1184 = vpack.c.b16 %v864, %v854
    %v1185 = vpack.c.b16 %v865, %v855
    %v1186 = vpack.c.b16 %v866, %v856
    %v1187 = vpack.c.b16 %v877, %v867
    %v1188 = vpack.c.b16 %v878, %v868
    %v1189 = vpack.c.b16 %v879, %v869
    %v1190 = vpack.c.b16 %v880, %v870
    %v1191 = vpack.c.b16 %v881, %v871
    %v1192 = vpack.c.b16 %v882, %v872
    %v1193 = vpack.c.b16 %v883, %v873
    %v1194 = vpack.c.b16 %v884, %v874
    %v1195 = vpack.c.b16 %v885, %v875
    %v1196 = vpack.c.b16 %v886, %v876
    %v1197 = vpack.c.b16 %v897, %v887
    %v1198 = vpack.c.b16 %v898, %v888
    %v1199 = vpack.c.b16 %v899, %v889
    %v1200 = vpack.c.b16 %v900, %v890
    %v1201 = vpack.c.b16 %v901, %v891
    %v1202 = vpack.c.b16 %v902, %v892
    %v1203 = vpack.c.b16 %v903, %v893
    %v1204 = vpack.c.b16 %v904, %v894
    %v1205 = vpack.c.b16 %v905, %v895
    %v1206 = vpack.c.b16 %v906, %v896
    %v1207 = vpack.c.b16 %v917, %v907
    %v1208 = vpack.c.b16 %v918, %v908
    %v1209 = vpack.c.b16 %v919, %v909
    %v1210 = vpack.c.b16 %v920, %v910
    %v1211 = vpack.c.b16 %v921, %v911
    %v1212 = vpack.c.b16 %v922, %v912
    %v1213 = vpack.c.b16 %v923, %v913
    %v1214 = vpack.c.b16 %v924, %v914
    %v1215 = vpack.c.b16 %v925, %v915
    %v1216 = vpack.c.b16 %v926, %v916
    %v1217 = vpack.c.b16 %v937, %v927
    %v1218 = vpack.c.b16 %v938, %v928
    %v1219 = vpack.c.b16 %v939, %v929
    %v1220 = vpack.c.b16 %v940, %v930
    %v1221 = vpack.c.b16 %v941, %v931
    %v1222 = vpack.c.b16 %v942, %v932
    %v1223 = vpack.c.b16 %v943, %v933
    %v1224 = vpack.c.b16 %v944, %v934
    %v1225 = vpack.c.b16 %v945, %v935
    %v1226 = vpack.c.b16 %v946, %v936
    %v1227 = vpack.c.b16 %v957, %v947
    %v1228 = vpack.c.b16 %v958, %v948
    %v1229 = vpack.c.b16 %v959, %v949
    %v1230 = vpack.c.b16 %v960, %v950
    %v1231 = vpack.c.b16 %v961, %v951
    %v1232 = vpack.c.b16 %v962, %v952
    %v1233 = vpack.c.b16 %v963, %v953
    %v1234 = vpack.c.b16 %v964, %v954
    %v1235 = vpack.c.b16 %v965, %v955
    %v1236 = vpack.c.b16 %v966, %v956
    %v1237 = vpack.c.b16 %v977, %v967
    %v1238 = vpack.c.b16 %v978, %v968
    %v1239 = vpack.c.b16 %v979, %v969
    %v1240 = vpack.c.b16 %v980, %v970
    %v1241 = vpack.c.b16 %v981, %v971
    %v1242 = vpack.c.b16 %v982, %v972
    %v1243 = vpack.c.b16 %v983, %v973
    %v1244 = vpack.c.b16 %v984, %v974
    %v1245 = vpack.c.b16 %v985, %v975
    %v1246 = vpack.c.b16 %v986, %v976
    %v1247 = vpack.c.b16 %v997, %v987
    %v1248 = vpack.c.b16 %v998, %v988
    %v1249 = vpack.c.b16 %v999, %v989
    %v1250 = vpack.c.b16 %v1000, %v990
    %v1251 = vpack.c.b16 %v1001, %v991
    %v1252 = vpack.c.b16 %v1002, %v992
    %v1253 = vpack.c.b16 %v1003, %v993
    %v1254 = vpack.c.b16 %v1004, %v994
    %v1255 = vpack.c.b16 %v1005, %v995
    %v1256 = vpack.c.b16 %v1006, %v996
    %v1257 = vpack.c.b16 %v1017, %v1007
    %v1258 = vpack.c.b16 %v1018, %v1008
    %v1259 = vpack.c.b16 %v1019, %v1009
    %v1260 = vpack.c.b16 %v1020, %v1010
    %v1261 = vpack.c.b16 %v1021, %v1011
    %v1262 = vpack.c.b16 %v1022, %v1012
    %v1263 = vpack.c.b16 %v1023, %v1013
    %v1264 = vpack.c.b16 %v1024, %v1014
    %v1265 = vpack.c.b16 %v1025, %v1015
    %v1266 = vpack.c.b16 %v1026, %v1016
    %1507 = vmatpush.bf16.msra.mxu0 %v1097
    %1508 = vmatpush.bf16.msra.mxu0 %v1087
    %1509 = vmatpush.bf16.msra.mxu0 %v1077
    %1510 = vmatpush.bf16.msra.mxu0 %v1067
    %1511 = vmatpush.bf16.msra.mxu0 %v1057
    %1512 = vmatpush.bf16.msra.mxu0 %v1047
    %1513 = vmatpush.bf16.msra.mxu0 %v1037
    %1514 = vmatpush.bf16.msra.mxu0 %v1027
    %1515 = vmatmul.bf16.gmra.mxu0 %v301
    %v1516 = vpop.f32.mrf.mxu0
    %v1517 = vadd.f32 0.0, %v1516
    %v1518 = vpop.f32.mrf.mxu0
    %1519 = vdwg.mxu0
    %1520 = vmatpush.bf16.msra.mxu0 %v1177
    %1521 = vmatpush.bf16.msra.mxu0 %v1167
    %1522 = vmatpush.bf16.msra.mxu0 %v1157
    %1523 = vmatpush.bf16.msra.mxu0 %v1147
    %1524 = vmatpush.bf16.msra.mxu0 %v1137
    %1525 = vmatpush.bf16.msra.mxu0 %v1127
    %1526 = vmatpush.bf16.msra.mxu0 %v1117
    %1527 = vmatpush.bf16.msra.mxu0 %v1107
    %1528 = vmatmul.bf16.gmra.mxu0 %v302
    %v1529 = vpop.f32.mrf.mxu0
    %v1530 = vadd.f32 %v1517, %v1529
    %v1531 = vpop.f32.mrf.mxu0
    %1532 = vdwg.mxu0
    %1533 = vmatpush.bf16.msra.mxu0 %v1257
    %1534 = vmatpush.bf16.msra.mxu0 %v1247
    %1535 = vmatpush.bf16.msra.mxu0 %v1237
    %1536 = vmatpush.bf16.msra.mxu0 %v1227
    %1537 = vmatpush.bf16.msra.mxu0 %v1217
    %1538 = vmatpush.bf16.msra.mxu0 %v1207
    %1539 = vmatpush.bf16.msra.mxu0 %v1197
    %1540 = vmatpush.bf16.msra.mxu0 %v1187
    %1541 = vmatmul.bf16.gmra.mxu0 %v303
    %v1542 = vpop.f32.mrf.mxu0
    %v1543 = vadd.f32 %v1530, %v1542
    %v1544 = vpop.f32.mrf.mxu0
    %1545 = vdwg.mxu0
    %1546 = vmatpush.bf16.msra.mxu0 %v1098
    %1547 = vmatpush.bf16.msra.mxu0 %v1088
    %1548 = vmatpush.bf16.msra.mxu0 %v1078
    %1549 = vmatpush.bf16.msra.mxu0 %v1068
    %1550 = vmatpush.bf16.msra.mxu0 %v1058
    %1551 = vmatpush.bf16.msra.mxu0 %v1048
    %1552 = vmatpush.bf16.msra.mxu0 %v1038
    %1553 = vmatpush.bf16.msra.mxu0 %v1028
    %1554 = vmatmul.bf16.gmra.mxu0 %v301
    %v1555 = vpop.f32.mrf.mxu0
    %v1556 = vadd.f32 0.0, %v1555
    %v1557 = vpop.f32.mrf.mxu0
    %1558 = vdwg.mxu0
    %1559 = vmatpush.bf16.msra.mxu0 %v1178
    %1560 = vmatpush.bf16.msra.mxu0 %v1168
    %1561 = vmatpush.bf16.msra.mxu0 %v1158
    %1562 = vmatpush.bf16.msra.mxu0 %v1148
    %1563 = vmatpush.bf16.msra.mxu0 %v1138
    %1564 = vmatpush.bf16.msra.mxu0 %v1128
    %1565 = vmatpush.bf16.msra.mxu0 %v1118
    %1566 = vmatpush.bf16.msra.mxu0 %v1108
    %1567 = vmatmul.bf16.gmra.mxu0 %v302
    %v1568 = vpop.f32.mrf.mxu0
    %v1569 = vadd.f32 %v1556, %v1568
    %v1570 = vpop.f32.mrf.mxu0
    %1571 = vdwg.mxu0
    %1572 = vmatpush.bf16.msra.mxu0 %v1258
    %1573 = vmatpush.bf16.msra.mxu0 %v1248
    %1574 = vmatpush.bf16.msra.mxu0 %v1238
    %1575 = vmatpush.bf16.msra.mxu0 %v1228
    %1576 = vmatpush.bf16.msra.mxu0 %v1218
    %1577 = vmatpush.bf16.msra.mxu0 %v1208
    %1578 = vmatpush.bf16.msra.mxu0 %v1198
    %1579 = vmatpush.bf16.msra.mxu0 %v1188
    %1580 = vmatmul.bf16.gmra.mxu0 %v303
    %v1581 = vpop.f32.mrf.mxu0
    %v1582 = vadd.f32 %v1569, %v1581
    %v1583 = vpop.f32.mrf.mxu0
    %1584 = vdwg.mxu0
    %1585 = vmatpush.bf16.msra.mxu0 %v1099
    %1586 = vmatpush.bf16.msra.mxu0 %v1089
    %1587 = vmatpush.bf16.msra.mxu0 %v1079
    %1588 = vmatpush.bf16.msra.mxu0 %v1069
    %1589 = vmatpush.bf16.msra.mxu0 %v1059
    %1590 = vmatpush.bf16.msra.mxu0 %v1049
    %1591 = vmatpush.bf16.msra.mxu0 %v1039
    %1592 = vmatpush.bf16.msra.mxu0 %v1029
    %1593 = vmatmul.bf16.gmra.mxu0 %v301
    %v1594 = vpop.f32.mrf.mxu0
    %v1595 = vadd.f32 0.0, %v1594
    %v1596 = vpop.f32.mrf.mxu0
    %1597 = vdwg.mxu0
    %1598 = vmatpush.bf16.msra.mxu0 %v1179
    %1599 = vmatpush.bf16.msra.mxu0 %v1169
    %1600 = vmatpush.bf16.msra.mxu0 %v1159
    %1601 = vmatpush.bf16.msra.mxu0 %v1149
    %1602 = vmatpush.bf16.msra.mxu0 %v1139
    %1603 = vmatpush.bf16.msra.mxu0 %v1129
    %1604 = vmatpush.bf16.msra.mxu0 %v1119
    %1605 = vmatpush.bf16.msra.mxu0 %v1109
    %1606 = vmatmul.bf16.gmra.mxu0 %v302
    %v1607 = vpop.f32.mrf.mxu0
    %v1608 = vadd.f32 %v1595, %v1607
    %v1609 = vpop.f32.mrf.mxu0
    %1610 = vdwg.mxu0
    %1611 = vmatpush.bf16.msra.mxu0 %v1259
    %1612 = vmatpush.bf16.msra.mxu0 %v1249
    %1613 = vmatpush.bf16.msra.mxu0 %v1239
    %1614 = vmatpush.bf16.msra.mxu0 %v1229
    %1615 = vmatpush.bf16.msra.mxu0 %v1219
    %1616 = vmatpush.bf16.msra.mxu0 %v1209
    %1617 = vmatpush.bf16.msra.mxu0 %v1199
    %1618 = vmatpush.bf16.msra.mxu0 %v1189
    %1619 = vmatmul.bf16.gmra.mxu0 %v303
    %v1620 = vpop.f32.mrf.mxu0
    %v1621 = vadd.f32 %v1608, %v1620
    %v1622 = vpop.f32.mrf.mxu0
    %1623 = vdwg.mxu0
    %1624 = vmatpush.bf16.msra.mxu0 %v1100
    %1625 = vmatpush.bf16.msra.mxu0 %v1090
    %1626 = vmatpush.bf16.msra.mxu0 %v1080
    %1627 = vmatpush.bf16.msra.mxu0 %v1070
    %1628 = vmatpush.bf16.msra.mxu0 %v1060
    %1629 = vmatpush.bf16.msra.mxu0 %v1050
    %1630 = vmatpush.bf16.msra.mxu0 %v1040
    %1631 = vmatpush.bf16.msra.mxu0 %v1030
    %1632 = vmatmul.bf16.gmra.mxu0 %v301
    %v1633 = vpop.f32.mrf.mxu0
    %v1634 = vadd.f32 0.0, %v1633
    %v1635 = vpop.f32.mrf.mxu0
    %1636 = vdwg.mxu0
    %1637 = vmatpush.bf16.msra.mxu0 %v1180
    %1638 = vmatpush.bf16.msra.mxu0 %v1170
    %1639 = vmatpush.bf16.msra.mxu0 %v1160
    %1640 = vmatpush.bf16.msra.mxu0 %v1150
    %1641 = vmatpush.bf16.msra.mxu0 %v1140
    %1642 = vmatpush.bf16.msra.mxu0 %v1130
    %1643 = vmatpush.bf16.msra.mxu0 %v1120
    %1644 = vmatpush.bf16.msra.mxu0 %v1110
    %1645 = vmatmul.bf16.gmra.mxu0 %v302
    %v1646 = vpop.f32.mrf.mxu0
    %v1647 = vadd.f32 %v1634, %v1646
    %v1648 = vpop.f32.mrf.mxu0
    %1649 = vdwg.mxu0
    %1650 = vmatpush.bf16.msra.mxu0 %v1260
    %1651 = vmatpush.bf16.msra.mxu0 %v1250
    %1652 = vmatpush.bf16.msra.mxu0 %v1240
    %1653 = vmatpush.bf16.msra.mxu0 %v1230
    %1654 = vmatpush.bf16.msra.mxu0 %v1220
    %1655 = vmatpush.bf16.msra.mxu0 %v1210
    %1656 = vmatpush.bf16.msra.mxu0 %v1200
    %1657 = vmatpush.bf16.msra.mxu0 %v1190
    %1658 = vmatmul.bf16.gmra.mxu0 %v303
    %v1659 = vpop.f32.mrf.mxu0
    %v1660 = vadd.f32 %v1647, %v1659
    %v1661 = vpop.f32.mrf.mxu0
    %1662 = vdwg.mxu0
    %1663 = vmatpush.bf16.msra.mxu0 %v1101
    %1664 = vmatpush.bf16.msra.mxu0 %v1091
    %1665 = vmatpush.bf16.msra.mxu0 %v1081
    %1666 = vmatpush.bf16.msra.mxu0 %v1071
    %1667 = vmatpush.bf16.msra.mxu0 %v1061
    %1668 = vmatpush.bf16.msra.mxu0 %v1051
    %1669 = vmatpush.bf16.msra.mxu0 %v1041
    %1670 = vmatpush.bf16.msra.mxu0 %v1031
    %1671 = vmatmul.bf16.gmra.mxu0 %v301
    %v1672 = vpop.f32.mrf.mxu0
    %v1673 = vadd.f32 0.0, %v1672
    %v1674 = vpop.f32.mrf.mxu0
    %1675 = vdwg.mxu0
    %1676 = vmatpush.bf16.msra.mxu0 %v1181
    %1677 = vmatpush.bf16.msra.mxu0 %v1171
    %1678 = vmatpush.bf16.msra.mxu0 %v1161
    %1679 = vmatpush.bf16.msra.mxu0 %v1151
    %1680 = vmatpush.bf16.msra.mxu0 %v1141
    %1681 = vmatpush.bf16.msra.mxu0 %v1131
    %1682 = vmatpush.bf16.msra.mxu0 %v1121
    %1683 = vmatpush.bf16.msra.mxu0 %v1111
    %1684 = vmatmul.bf16.gmra.mxu0 %v302
    %v1685 = vpop.f32.mrf.mxu0
    %v1686 = vadd.f32 %v1673, %v1685
    %v1687 = vpop.f32.mrf.mxu0
    %1688 = vdwg.mxu0
    %1689 = vmatpush.bf16.msra.mxu0 %v1261
    %1690 = vmatpush.bf16.msra.mxu0 %v1251
    %1691 = vmatpush.bf16.msra.mxu0 %v1241
    %1692 = vmatpush.bf16.msra.mxu0 %v1231
    %1693 = vmatpush.bf16.msra.mxu0 %v1221
    %1694 = vmatpush.bf16.msra.mxu0 %v1211
    %1695 = vmatpush.bf16.msra.mxu0 %v1201
    %1696 = vmatpush.bf16.msra.mxu0 %v1191
    %1697 = vmatmul.bf16.gmra.mxu0 %v303
    %v1698 = vpop.f32.mrf.mxu0
    %v1699 = vadd.f32 %v1686, %v1698
    %v1700 = vpop.f32.mrf.mxu0
    %1701 = vdwg.mxu0
    %1702 = vmatpush.bf16.msra.mxu0 %v1102
    %1703 = vmatpush.bf16.msra.mxu0 %v1092
    %1704 = vmatpush.bf16.msra.mxu0 %v1082
    %1705 = vmatpush.bf16.msra.mxu0 %v1072
    %1706 = vmatpush.bf16.msra.mxu0 %v1062
    %1707 = vmatpush.bf16.msra.mxu0 %v1052
    %1708 = vmatpush.bf16.msra.mxu0 %v1042
    %1709 = vmatpush.bf16.msra.mxu0 %v1032
    %1710 = vmatmul.bf16.gmra.mxu0 %v301
    %v1711 = vpop.f32.mrf.mxu0
    %v1712 = vadd.f32 0.0, %v1711
    %v1713 = vpop.f32.mrf.mxu0
    %1714 = vdwg.mxu0
    %1715 = vmatpush.bf16.msra.mxu0 %v1182
    %1716 = vmatpush.bf16.msra.mxu0 %v1172
    %1717 = vmatpush.bf16.msra.mxu0 %v1162
    %1718 = vmatpush.bf16.msra.mxu0 %v1152
    %1719 = vmatpush.bf16.msra.mxu0 %v1142
    %1720 = vmatpush.bf16.msra.mxu0 %v1132
    %1721 = vmatpush.bf16.msra.mxu0 %v1122
    %1722 = vmatpush.bf16.msra.mxu0 %v1112
    %1723 = vmatmul.bf16.gmra.mxu0 %v302
    %v1724 = vpop.f32.mrf.mxu0
    %v1725 = vadd.f32 %v1712, %v1724
    %v1726 = vpop.f32.mrf.mxu0
    %1727 = vdwg.mxu0
    %1728 = vmatpush.bf16.msra.mxu0 %v1262
    %1729 = vmatpush.bf16.msra.mxu0 %v1252
    %1730 = vmatpush.bf16.msra.mxu0 %v1242
    %1731 = vmatpush.bf16.msra.mxu0 %v1232
    %1732 = vmatpush.bf16.msra.mxu0 %v1222
    %1733 = vmatpush.bf16.msra.mxu0 %v1212
    %1734 = vmatpush.bf16.msra.mxu0 %v1202
    %1735 = vmatpush.bf16.msra.mxu0 %v1192
    %1736 = vmatmul.bf16.gmra.mxu0 %v303
    %v1737 = vpop.f32.mrf.mxu0
    %v1738 = vadd.f32 %v1725, %v1737
    %v1739 = vpop.f32.mrf.mxu0
    %1740 = vdwg.mxu0
    %1741 = vmatpush.bf16.msra.mxu0 %v1103
    %1742 = vmatpush.bf16.msra.mxu0 %v1093
    %1743 = vmatpush.bf16.msra.mxu0 %v1083
    %1744 = vmatpush.bf16.msra.mxu0 %v1073
    %1745 = vmatpush.bf16.msra.mxu0 %v1063
    %1746 = vmatpush.bf16.msra.mxu0 %v1053
    %1747 = vmatpush.bf16.msra.mxu0 %v1043
    %1748 = vmatpush.bf16.msra.mxu0 %v1033
    %1749 = vmatmul.bf16.gmra.mxu0 %v301
    %v1750 = vpop.f32.mrf.mxu0
    %v1751 = vadd.f32 0.0, %v1750
    %v1752 = vpop.f32.mrf.mxu0
    %1753 = vdwg.mxu0
    %1754 = vmatpush.bf16.msra.mxu0 %v1183
    %1755 = vmatpush.bf16.msra.mxu0 %v1173
    %1756 = vmatpush.bf16.msra.mxu0 %v1163
    %1757 = vmatpush.bf16.msra.mxu0 %v1153
    %1758 = vmatpush.bf16.msra.mxu0 %v1143
    %1759 = vmatpush.bf16.msra.mxu0 %v1133
    %1760 = vmatpush.bf16.msra.mxu0 %v1123
    %1761 = vmatpush.bf16.msra.mxu0 %v1113
    %1762 = vmatmul.bf16.gmra.mxu0 %v302
    %v1763 = vpop.f32.mrf.mxu0
    %v1764 = vadd.f32 %v1751, %v1763
    %v1765 = vpop.f32.mrf.mxu0
    %1766 = vdwg.mxu0
    %1767 = vmatpush.bf16.msra.mxu0 %v1263
    %1768 = vmatpush.bf16.msra.mxu0 %v1253
    %1769 = vmatpush.bf16.msra.mxu0 %v1243
    %1770 = vmatpush.bf16.msra.mxu0 %v1233
    %1771 = vmatpush.bf16.msra.mxu0 %v1223
    %1772 = vmatpush.bf16.msra.mxu0 %v1213
    %1773 = vmatpush.bf16.msra.mxu0 %v1203
    %1774 = vmatpush.bf16.msra.mxu0 %v1193
    %1775 = vmatmul.bf16.gmra.mxu0 %v303
    %v1776 = vpop.f32.mrf.mxu0
    %v1777 = vadd.f32 %v1764, %v1776
    %v1778 = vpop.f32.mrf.mxu0
    %1779 = vdwg.mxu0
    %1780 = vmatpush.bf16.msra.mxu0 %v1104
    %1781 = vmatpush.bf16.msra.mxu0 %v1094
    %1782 = vmatpush.bf16.msra.mxu0 %v1084
    %1783 = vmatpush.bf16.msra.mxu0 %v1074
    %1784 = vmatpush.bf16.msra.mxu0 %v1064
    %1785 = vmatpush.bf16.msra.mxu0 %v1054
    %1786 = vmatpush.bf16.msra.mxu0 %v1044
    %1787 = vmatpush.bf16.msra.mxu0 %v1034
    %1788 = vmatmul.bf16.gmra.mxu0 %v301
    %v1789 = vpop.f32.mrf.mxu0
    %v1790 = vadd.f32 0.0, %v1789
    %v1791 = vpop.f32.mrf.mxu0
    %1792 = vdwg.mxu0
    %1793 = vmatpush.bf16.msra.mxu0 %v1184
    %1794 = vmatpush.bf16.msra.mxu0 %v1174
    %1795 = vmatpush.bf16.msra.mxu0 %v1164
    %1796 = vmatpush.bf16.msra.mxu0 %v1154
    %1797 = vmatpush.bf16.msra.mxu0 %v1144
    %1798 = vmatpush.bf16.msra.mxu0 %v1134
    %1799 = vmatpush.bf16.msra.mxu0 %v1124
    %1800 = vmatpush.bf16.msra.mxu0 %v1114
    %1801 = vmatmul.bf16.gmra.mxu0 %v302
    %v1802 = vpop.f32.mrf.mxu0
    %v1803 = vadd.f32 %v1790, %v1802
    %v1804 = vpop.f32.mrf.mxu0
    %1805 = vdwg.mxu0
    %1806 = vmatpush.bf16.msra.mxu0 %v1264
    %1807 = vmatpush.bf16.msra.mxu0 %v1254
    %1808 = vmatpush.bf16.msra.mxu0 %v1244
    %1809 = vmatpush.bf16.msra.mxu0 %v1234
    %1810 = vmatpush.bf16.msra.mxu0 %v1224
    %1811 = vmatpush.bf16.msra.mxu0 %v1214
    %1812 = vmatpush.bf16.msra.mxu0 %v1204
    %1813 = vmatpush.bf16.msra.mxu0 %v1194
    %1814 = vmatmul.bf16.gmra.mxu0 %v303
    %v1815 = vpop.f32.mrf.mxu0
    %v1816 = vadd.f32 %v1803, %v1815
    %v1817 = vpop.f32.mrf.mxu0
    %1818 = vdwg.mxu0
    %1819 = vmatpush.bf16.msra.mxu0 %v1105
    %1820 = vmatpush.bf16.msra.mxu0 %v1095
    %1821 = vmatpush.bf16.msra.mxu0 %v1085
    %1822 = vmatpush.bf16.msra.mxu0 %v1075
    %1823 = vmatpush.bf16.msra.mxu0 %v1065
    %1824 = vmatpush.bf16.msra.mxu0 %v1055
    %1825 = vmatpush.bf16.msra.mxu0 %v1045
    %1826 = vmatpush.bf16.msra.mxu0 %v1035
    %1827 = vmatmul.bf16.gmra.mxu0 %v301
    %v1828 = vpop.f32.mrf.mxu0
    %v1829 = vadd.f32 0.0, %v1828
    %v1830 = vpop.f32.mrf.mxu0
    %1831 = vdwg.mxu0
    %1832 = vmatpush.bf16.msra.mxu0 %v1185
    %1833 = vmatpush.bf16.msra.mxu0 %v1175
    %1834 = vmatpush.bf16.msra.mxu0 %v1165
    %1835 = vmatpush.bf16.msra.mxu0 %v1155
    %1836 = vmatpush.bf16.msra.mxu0 %v1145
    %1837 = vmatpush.bf16.msra.mxu0 %v1135
    %1838 = vmatpush.bf16.msra.mxu0 %v1125
    %1839 = vmatpush.bf16.msra.mxu0 %v1115
    %1840 = vmatmul.bf16.gmra.mxu0 %v302
    %v1841 = vpop.f32.mrf.mxu0
    %v1842 = vadd.f32 %v1829, %v1841
    %v1843 = vpop.f32.mrf.mxu0
    %1844 = vdwg.mxu0
    %1845 = vmatpush.bf16.msra.mxu0 %v1265
    %1846 = vmatpush.bf16.msra.mxu0 %v1255
    %1847 = vmatpush.bf16.msra.mxu0 %v1245
    %1848 = vmatpush.bf16.msra.mxu0 %v1235
    %1849 = vmatpush.bf16.msra.mxu0 %v1225
    %1850 = vmatpush.bf16.msra.mxu0 %v1215
    %1851 = vmatpush.bf16.msra.mxu0 %v1205
    %1852 = vmatpush.bf16.msra.mxu0 %v1195
    %1853 = vmatmul.bf16.gmra.mxu0 %v303
    %v1854 = vpop.f32.mrf.mxu0
    %v1855 = vadd.f32 %v1842, %v1854
    %v1856 = vpop.f32.mrf.mxu0
    %1857 = vdwg.mxu0
    %1858 = vmatpush.bf16.msra.mxu0 %v1106
    %1859 = vmatpush.bf16.msra.mxu0 %v1096
    %1860 = vmatpush.bf16.msra.mxu0 %v1086
    %1861 = vmatpush.bf16.msra.mxu0 %v1076
    %1862 = vmatpush.bf16.msra.mxu0 %v1066
    %1863 = vmatpush.bf16.msra.mxu0 %v1056
    %1864 = vmatpush.bf16.msra.mxu0 %v1046
    %1865 = vmatpush.bf16.msra.mxu0 %v1036
    %1866 = vmatmul.bf16.gmra.mxu0 %v301
    %v1867 = vpop.f32.mrf.mxu0
    %v1868 = vadd.f32 0.0, %v1867
    %v1869 = vpop.f32.mrf.mxu0
    %1870 = vdwg.mxu0
    %1871 = vmatpush.bf16.msra.mxu0 %v1186
    %1872 = vmatpush.bf16.msra.mxu0 %v1176
    %1873 = vmatpush.bf16.msra.mxu0 %v1166
    %1874 = vmatpush.bf16.msra.mxu0 %v1156
    %1875 = vmatpush.bf16.msra.mxu0 %v1146
    %1876 = vmatpush.bf16.msra.mxu0 %v1136
    %1877 = vmatpush.bf16.msra.mxu0 %v1126
    %1878 = vmatpush.bf16.msra.mxu0 %v1116
    %1879 = vmatmul.bf16.gmra.mxu0 %v302
    %v1880 = vpop.f32.mrf.mxu0
    %v1881 = vadd.f32 %v1868, %v1880
    %v1882 = vpop.f32.mrf.mxu0
    %1883 = vdwg.mxu0
    %1884 = vmatpush.bf16.msra.mxu0 %v1266
    %1885 = vmatpush.bf16.msra.mxu0 %v1256
    %1886 = vmatpush.bf16.msra.mxu0 %v1246
    %1887 = vmatpush.bf16.msra.mxu0 %v1236
    %1888 = vmatpush.bf16.msra.mxu0 %v1226
    %1889 = vmatpush.bf16.msra.mxu0 %v1216
    %1890 = vmatpush.bf16.msra.mxu0 %v1206
    %1891 = vmatpush.bf16.msra.mxu0 %v1196
    %1892 = vmatmul.bf16.gmra.mxu0 %v303
    %v1893 = vpop.f32.mrf.mxu0
    %v1894 = vadd.f32 %v1881, %v1893
    %v1895 = vpop.f32.mrf.mxu0
    %1896 = vdwg.mxu0
    %v1897 = vadd.f32 %v44, %v1543
    %v1898 = vadd.f32 %v45, %v1582
    %v1899 = vadd.f32 %v46, %v1621
    %v1900 = vadd.f32 %v47, %v1660
    %v1901 = vadd.f32 %v48, %v1699
    %v1902 = vadd.f32 %v49, %v1738
    %v1903 = vadd.f32 %v50, %v1777
    %v1904 = vadd.f32 %v51, %v1816
    %v1905 = vadd.f32 %v52, %v1855
    %v1906 = vadd.f32 %v53, %v1894
    %1907 = vst [vmem:[#allocation2] sm:$0xff] %v1897
    %1908 = vst [vmem:[#allocation2 + $0x8] sm:$0xff] %v1898
    %1909 = vst [vmem:[#allocation2 + $0x10] sm:$0xff] %v1899
    %1910 = vst [vmem:[#allocation2 + $0x18] sm:$0xff] %v1900
    %1911 = vst [vmem:[#allocation2 + $0x20] sm:$0xff] %v1901
    %1912 = vst [vmem:[#allocation2 + $0x28] sm:$0xff] %v1902
    %1913 = vst [vmem:[#allocation2 + $0x30] sm:$0xff] %v1903
    %1914 = vst [vmem:[#allocation2 + $0x38] sm:$0xff] %v1904
    %1915 = vst [vmem:[#allocation2 + $0x40] sm:$0xff] %v1905
    %1916 = vst [vmem:[#allocation2 + $0x48] sm:$0xff] %v1906
    // Predicated region
    $region22: #{matmul_bias_act.1} parent=1 // pred_check
      %p1917 = pneg %p30
    $region23: #{matmul_bias_act.1} parent=1 // pred_check_branch
      %1919 = sbr.rel (%p1917) target = $region25
    $region24: #{matmul_bias_act.1} parent=1 // pred_region
      %v1920 = vld [vmem:[#allocation2] sm:$0xff]
      %v1921 = vld [vmem:[#allocation2 + $0x8] sm:$0xff]
      %v1922 = vld [vmem:[#allocation2 + $0x10] sm:$0xff]
      %v1923 = vld [vmem:[#allocation2 + $0x18] sm:$0xff]
      %v1924 = vld [vmem:[#allocation2 + $0x20] sm:$0xff]
      %v1925 = vld [vmem:[#allocation2 + $0x28] sm:$0xff]
      %v1926 = vld [vmem:[#allocation2 + $0x30] sm:$0xff]
      %v1927 = vld [vmem:[#allocation2 + $0x38] sm:$0xff]
      %v1928 = vld [vmem:[#allocation2 + $0x40] sm:$0xff]
      %v1929 = vld [vmem:[#allocation2 + $0x48] sm:$0xff]
      %v1930 = vld [vmem:[%s2] sm:$0xff]
      %v1931 = vld [vmem:[%s2 + $0x8] sm:$0x3]
      %v1934 = vperm.slane %v1930, 0
      %v1935 = vperm.slane %v1930, 1
      %v1936 = vperm.slane %v1930, 2
      %v1937 = vperm.slane %v1930, 3
      %v1938 = vperm.slane %v1930, 4
      %v1939 = vperm.slane %v1930, 5
      %v1940 = vperm.slane %v1930, 6
      %v1941 = vperm.slane %v1930, 7
      %v1942 = vperm.slane %v1931, 0
      %v1943 = vperm.slane %v1931, 1
      %v1954 = vadd.f32 %v1920, %v1934
      %v1955 = vadd.f32 %v1921, %v1935
      %v1956 = vadd.f32 %v1922, %v1936
      %v1957 = vadd.f32 %v1923, %v1937
      %v1958 = vadd.f32 %v1924, %v1938
      %v1959 = vadd.f32 %v1925, %v1939
      %v1960 = vadd.f32 %v1926, %v1940
      %v1961 = vadd.f32 %v1927, %v1941
      %v1962 = vadd.f32 %v1928, %v1942
      %v1963 = vadd.f32 %v1929, %v1943
      %v1964 = vxor.u32 %v1954, 2147483648
      %v1965 = vxor.u32 %v1955, 2147483648
      %v1966 = vxor.u32 %v1956, 2147483648
      %v1967 = vxor.u32 %v1957, 2147483648
      %v1968 = vxor.u32 %v1958, 2147483648
      %v1969 = vxor.u32 %v1959, 2147483648
      %v1970 = vxor.u32 %v1960, 2147483648
      %v1971 = vxor.u32 %v1961, 2147483648
      %v1972 = vxor.u32 %v1962, 2147483648
      %v1973 = vxor.u32 %v1963, 2147483648
      %v1974 = vmul.f32 %v1964, 1.442695
      %v1975 = vpow.pop %v1974
      %v1976 = vmul.f32 %v1965, 1.442695
      %v1977 = vpow.pop %v1976
      %v1978 = vmul.f32 %v1966, 1.442695
      %v1979 = vpow.pop %v1978
      %v1980 = vmul.f32 %v1967, 1.442695
      %v1981 = vpow.pop %v1980
      %v1982 = vmul.f32 %v1968, 1.442695
      %v1983 = vpow.pop %v1982
      %v1984 = vmul.f32 %v1969, 1.442695
      %v1985 = vpow.pop %v1984
      %v1986 = vmul.f32 %v1970, 1.442695
      %v1987 = vpow.pop %v1986
      %v1988 = vmul.f32 %v1971, 1.442695
      %v1989 = vpow.pop %v1988
      %v1990 = vmul.f32 %v1972, 1.442695
      %v1991 = vpow.pop %v1990
      %v1992 = vmul.f32 %v1973, 1.442695
      %v1993 = vpow.pop %v1992
      %v1994 = vadd.f32 %v1975, 1.0
      %v1995 = vadd.f32 %v1977, 1.0
      %v1996 = vadd.f32 %v1979, 1.0
      %v1997 = vadd.f32 %v1981, 1.0
      %v1998 = vadd.f32 %v1983, 1.0
      %v1999 = vadd.f32 %v1985, 1.0
      %v2000 = vadd.f32 %v1987, 1.0
      %v2001 = vadd.f32 %v1989, 1.0
      %v2002 = vadd.f32 %v1991, 1.0
      %v2003 = vadd.f32 %v1993, 1.0
      %v2004 = vrcp.pop %v1994
      %v2005 = vmul.f32 %v1994, %v2004
      %v2006 = vsub.f32 1.0, %v2005
      %v2007 = vmul.f32 %v2004, %v2006
      %v2008 = vadd.f32 %v2004, %v2007
      %vm2009 = vweird.f32 %v1994
      %vm2010 = vweird.f32 %v2004
      %vm2011 = vmor %vm2009, %vm2010
      %v2012 = vsel %vm2011, %v2004, %v2008
      %v2013 = vand.u32 2147483647, %v1994
      %vm2014 = vcmp.eq.f32.partialorder %v2013, 8.507059e+37
      %v2015 = vand.u32 %v1994, 2147483648
      %v2016 = vor.u32 1.1754944e-38, %v2015
      %v2017 = vsel %vm2014, %v2016, %v2012
      %v2018 = vmul.f32 1.0, %v2017
      %v2019 = vrcp.pop %v1995
      %v2020 = vmul.f32 %v1995, %v2019
      %v2021 = vsub.f32 1.0, %v2020
      %v2022 = vmul.f32 %v2019, %v2021
      %v2023 = vadd.f32 %v2019, %v2022
      %vm2024 = vweird.f32 %v1995
      %vm2025 = vweird.f32 %v2019
      %vm2026 = vmor %vm2024, %vm2025
      %v2027 = vsel %vm2026, %v2019, %v2023
      %v2028 = vand.u32 2147483647, %v1995
      %vm2029 = vcmp.eq.f32.partialorder %v2028, 8.507059e+37
      %v2030 = vand.u32 %v1995, 2147483648
      %v2031 = vor.u32 1.1754944e-38, %v2030
      %v2032 = vsel %vm2029, %v2031, %v2027
      %v2033 = vmul.f32 1.0, %v2032
      %v2034 = vrcp.pop %v1996
      %v2035 = vmul.f32 %v1996, %v2034
      %v2036 = vsub.f32 1.0, %v2035
      %v2037 = vmul.f32 %v2034, %v2036
      %v2038 = vadd.f32 %v2034, %v2037
      %vm2039 = vweird.f32 %v1996
      %vm2040 = vweird.f32 %v2034
      %vm2041 = vmor %vm2039, %vm2040
      %v2042 = vsel %vm2041, %v2034, %v2038
      %v2043 = vand.u32 2147483647, %v1996
      %vm2044 = vcmp.eq.f32.partialorder %v2043, 8.507059e+37
      %v2045 = vand.u32 %v1996, 2147483648
      %v2046 = vor.u32 1.1754944e-38, %v2045
      %v2047 = vsel %vm2044, %v2046, %v2042
      %v2048 = vmul.f32 1.0, %v2047
      %v2049 = vrcp.pop %v1997
      %v2050 = vmul.f32 %v1997, %v2049
      %v2051 = vsub.f32 1.0, %v2050
      %v2052 = vmul.f32 %v2049, %v2051
      %v2053 = vadd.f32 %v2049, %v2052
      %vm2054 = vweird.f32 %v1997
      %vm2055 = vweird.f32 %v2049
      %vm2056 = vmor %vm2054, %vm2055
      %v2057 = vsel %vm2056, %v2049, %v2053
      %v2058 = vand.u32 2147483647, %v1997
      %vm2059 = vcmp.eq.f32.partialorder %v2058, 8.507059e+37
      %v2060 = vand.u32 %v1997, 2147483648
      %v2061 = vor.u32 1.1754944e-38, %v2060
      %v2062 = vsel %vm2059, %v2061, %v2057
      %v2063 = vmul.f32 1.0, %v2062
      %v2064 = vrcp.pop %v1998
      %v2065 = vmul.f32 %v1998, %v2064
      %v2066 = vsub.f32 1.0, %v2065
      %v2067 = vmul.f32 %v2064, %v2066
      %v2068 = vadd.f32 %v2064, %v2067
      %vm2069 = vweird.f32 %v1998
      %vm2070 = vweird.f32 %v2064
      %vm2071 = vmor %vm2069, %vm2070
      %v2072 = vsel %vm2071, %v2064, %v2068
      %v2073 = vand.u32 2147483647, %v1998
      %vm2074 = vcmp.eq.f32.partialorder %v2073, 8.507059e+37
      %v2075 = vand.u32 %v1998, 2147483648
      %v2076 = vor.u32 1.1754944e-38, %v2075
      %v2077 = vsel %vm2074, %v2076, %v2072
      %v2078 = vmul.f32 1.0, %v2077
      %v2079 = vrcp.pop %v1999
      %v2080 = vmul.f32 %v1999, %v2079
      %v2081 = vsub.f32 1.0, %v2080
      %v2082 = vmul.f32 %v2079, %v2081
      %v2083 = vadd.f32 %v2079, %v2082
      %vm2084 = vweird.f32 %v1999
      %vm2085 = vweird.f32 %v2079
      %vm2086 = vmor %vm2084, %vm2085
      %v2087 = vsel %vm2086, %v2079, %v2083
      %v2088 = vand.u32 2147483647, %v1999
      %vm2089 = vcmp.eq.f32.partialorder %v2088, 8.507059e+37
      %v2090 = vand.u32 %v1999, 2147483648
      %v2091 = vor.u32 1.1754944e-38, %v2090
      %v2092 = vsel %vm2089, %v2091, %v2087
      %v2093 = vmul.f32 1.0, %v2092
      %v2094 = vrcp.pop %v2000
      %v2095 = vmul.f32 %v2000, %v2094
      %v2096 = vsub.f32 1.0, %v2095
      %v2097 = vmul.f32 %v2094, %v2096
      %v2098 = vadd.f32 %v2094, %v2097
      %vm2099 = vweird.f32 %v2000
      %vm2100 = vweird.f32 %v2094
      %vm2101 = vmor %vm2099, %vm2100
      %v2102 = vsel %vm2101, %v2094, %v2098
      %v2103 = vand.u32 2147483647, %v2000
      %vm2104 = vcmp.eq.f32.partialorder %v2103, 8.507059e+37
      %v2105 = vand.u32 %v2000, 2147483648
      %v2106 = vor.u32 1.1754944e-38, %v2105
      %v2107 = vsel %vm2104, %v2106, %v2102
      %v2108 = vmul.f32 1.0, %v2107
      %v2109 = vrcp.pop %v2001
      %v2110 = vmul.f32 %v2001, %v2109
      %v2111 = vsub.f32 1.0, %v2110
      %v2112 = vmul.f32 %v2109, %v2111
      %v2113 = vadd.f32 %v2109, %v2112
      %vm2114 = vweird.f32 %v2001
      %vm2115 = vweird.f32 %v2109
      %vm2116 = vmor %vm2114, %vm2115
      %v2117 = vsel %vm2116, %v2109, %v2113
      %v2118 = vand.u32 2147483647, %v2001
      %vm2119 = vcmp.eq.f32.partialorder %v2118, 8.507059e+37
      %v2120 = vand.u32 %v2001, 2147483648
      %v2121 = vor.u32 1.1754944e-38, %v2120
      %v2122 = vsel %vm2119, %v2121, %v2117
      %v2123 = vmul.f32 1.0, %v2122
      %v2124 = vrcp.pop %v2002
      %v2125 = vmul.f32 %v2002, %v2124
      %v2126 = vsub.f32 1.0, %v2125
      %v2127 = vmul.f32 %v2124, %v2126
      %v2128 = vadd.f32 %v2124, %v2127
      %vm2129 = vweird.f32 %v2002
      %vm2130 = vweird.f32 %v2124
      %vm2131 = vmor %vm2129, %vm2130
      %v2132 = vsel %vm2131, %v2124, %v2128
      %v2133 = vand.u32 2147483647, %v2002
      %vm2134 = vcmp.eq.f32.partialorder %v2133, 8.507059e+37
      %v2135 = vand.u32 %v2002, 2147483648
      %v2136 = vor.u32 1.1754944e-38, %v2135
      %v2137 = vsel %vm2134, %v2136, %v2132
      %v2138 = vmul.f32 1.0, %v2137
      %v2139 = vrcp.pop %v2003
      %v2140 = vmul.f32 %v2003, %v2139
      %v2141 = vsub.f32 1.0, %v2140
      %v2142 = vmul.f32 %v2139, %v2141
      %v2143 = vadd.f32 %v2139, %v2142
      %vm2144 = vweird.f32 %v2003
      %vm2145 = vweird.f32 %v2139
      %vm2146 = vmor %vm2144, %vm2145
      %v2147 = vsel %vm2146, %v2139, %v2143
      %v2148 = vand.u32 2147483647, %v2003
      %vm2149 = vcmp.eq.f32.partialorder %v2148, 8.507059e+37
      %v2150 = vand.u32 %v2003, 2147483648
      %v2151 = vor.u32 1.1754944e-38, %v2150
      %v2152 = vsel %vm2149, %v2151, %v2147
      %v2153 = vmul.f32 1.0, %v2152
      %v2154 = vmul.f32 %v1954, %v2018
      %v2155 = vmul.f32 %v1955, %v2033
      %v2156 = vmul.f32 %v1956, %v2048
      %v2157 = vmul.f32 %v1957, %v2063
      %v2158 = vmul.f32 %v1958, %v2078
      %v2159 = vmul.f32 %v1959, %v2093
      %v2160 = vmul.f32 %v1960, %v2108
      %v2161 = vmul.f32 %v1961, %v2123
      %v2162 = vmul.f32 %v1962, %v2138
      %v2163 = vmul.f32 %v1963, %v2153
      %2164 = vst [vmem:[%s3] sm:$0xff] %v2154
      %2165 = vst [vmem:[%s3 + $0x8] sm:$0xff] %v2155
      %2166 = vst [vmem:[%s3 + $0x10] sm:$0xff] %v2156
      %2167 = vst [vmem:[%s3 + $0x18] sm:$0xff] %v2157
      %2168 = vst [vmem:[%s3 + $0x20] sm:$0xff] %v2158
      %2169 = vst [vmem:[%s3 + $0x28] sm:$0xff] %v2159
      %2170 = vst [vmem:[%s3 + $0x30] sm:$0xff] %v2160
      %2171 = vst [vmem:[%s3 + $0x38] sm:$0xff] %v2161
      %2172 = vst [vmem:[%s3 + $0x40] sm:$0xff] %v2162
      %2173 = vst [vmem:[%s3 + $0x48] sm:$0xff] %v2163
    $region25: #{matmul_bias_act.1} parent=1 // pred_fallthru
      _
    // Predicated region
    $region26: #{matmul_bias_act.1} parent=1 // pred_check
      _
    $region27: #{matmul_bias_act.1} parent=1 // pred_check_branch
      %2175 = sbr.rel (0) target = $region29
    $region28: #{matmul_bias_act.1} parent=1 // pred_region
      _
    $region29: #{matmul_bias_act.1} parent=1 // pred_fallthru
      _
    // Predicated region
    $region30: #{matmul_bias_act.1} parent=1 // pred_check
      _
    $region31: #{matmul_bias_act.1} parent=1 // pred_check_branch
      %2177 = sbr.rel (0) target = $region33
    $region32: #{matmul_bias_act.1} parent=1 // pred_region
      _
    $region33: #{matmul_bias_act.1} parent=1 // pred_fallthru
      _
    %2178 = vsyncpa [#allocation4], 1

</llo_original>
